<compile_context>
chip_gen: v6e
topology: v6e:2x2x1
jax: 0.10.0
libtpu: 0.0.40
codegen_flags: <defaults>
</compile_context>

<pallas_src>
import functools
import math

import jax
import jax.numpy as jnp
from jax import lax
from jax.experimental import pallas as pl
from jax.experimental.pallas import tpu as pltpu


def _inception_conv_kernel(x_ref, w_ref, b_ref, o_ref, *, TH, W, K, C_in, Cop):
    # x_ref: (1, Hpc, Wp, C_in) bf16  padded input image (resident across the H-tile axis)
    # w_ref: (K*K*C_in, Cop)    bf16  combined, pre-scaled weights (resident)
    # b_ref: (1, Cop)           f32   combined, pre-scaled bias (resident)
    # o_ref: (1, TH*W, Cop)     f32   lane-dense output tile for this (batch, H-tile)
    h = pl.program_id(1)
    THp = TH + K - 1
    # Halo'd rows for this H tile: dynamic offset on a major (untiled) dim -> cheap view.
    xt = x_ref[0, pl.ds(h * TH, THp), :, :]                                   # (THp, Wp, C_in)
    # Width im2col built from the VMEM-resident tile (no HBM read amplification).
    xc = jnp.concatenate([xt[:, kx:kx + W, :] for kx in range(K)], axis=2)    # (THp, W, K*C_in)
    # Height im2col: row-shifted views are slices along a major dim (address offsets only).
    patch = jnp.concatenate([xc[ky:ky + TH] for ky in range(K)], axis=2)      # (TH, W, K*K*C_in)
    patch = patch.reshape(TH * W, K * K * C_in)     # W is a sublane-tile multiple here -> cheap
    # Single MXU matmul, contraction = K*K*C_in, f32 accumulation.
    acc = jnp.dot(patch, w_ref[...], preferred_element_type=jnp.float32)      # (TH*W, Cop)
    o_ref[0] = (acc + b_ref[...]).astype(o_ref.dtype)


def _pick_tile_h(H, W, target_rows=256):
    # TH*W is the second-to-last dim of the output block -> keep it a multiple of 8.
    m = 8 // math.gcd(W, 8)
    th = max(1, target_rows // max(W, 1))
    th = max(m, (th // m) * m)
    if th >= H:
        th = -(-H // m) * m
    return th


def inception_block_v1(x_nchw, weights, biases, *, tile_h=None):
    """x_nchw: (N, C_in, H, W); weights[i]: (C_out, C_in, 2i+1, 2i+1); biases[i]: (C_out,)."""
    num_kernels = len(weights)
    N, C_in, H, W = x_nchw.shape
    C_out = weights[0].shape[0]
    K = 2 * (num_kernels - 1) + 1
    P = (K - 1) // 2

    # --- fold the branches into one KxK conv (exact for same-padded odd kernels) and fold
    #     the 1/num_kernels mean into the weights/bias.
    w_comb = jnp.zeros((K, K, C_in, C_out), jnp.float32)
    for i, wi in enumerate(weights):
        k = 2 * i + 1
        off = (K - k) // 2
        w_comb = w_comb.at[off:off + k, off:off + k, :, :].add(
            jnp.transpose(wi, (2, 3, 1, 0)))                    # OIHW -> HWIO
    b_comb = jnp.zeros((C_out,), jnp.float32)
    for bi in biases:
        b_comb = b_comb + bi
    scale = 1.0 / num_kernels
    w_comb = w_comb * scale
    b_comb = b_comb * scale

    # --- lane-dense output: pad C_out up to a multiple of 128 (free on the MXU, unmasked stores).
    Cop = max(128, -(-C_out // 128) * 128)
    w_pad = jnp.zeros((K, K, C_in, Cop), jnp.float32).at[..., :C_out].set(w_comb)
    w_flat = w_pad.reshape(K * K * C_in, Cop).astype(jnp.bfloat16)
    b_pad = jnp.zeros((1, Cop), jnp.float32).at[0, :C_out].set(b_comb)

    # --- H tiling (bounds the im2col patch / accumulator per grid step).
    if tile_h is None:
        TH = _pick_tile_h(H, W)
    else:
        m = 8 // math.gcd(W, 8)
        TH = max(m, (-(-tile_h // m)) * m)
    n_th = -(-H // TH)
    Hc = n_th * TH
    TM = TH * W

    # --- NCHW -> NHWC, spatial zero pad (+ bottom pad up to the H tiling), bf16 into the MXU.
    x_nhwc = jnp.transpose(x_nchw, (0, 2, 3, 1))
    x_pad = jnp.pad(x_nhwc, ((0, 0), (P, P + (Hc - H)), (P, P), (0, 0))).astype(jnp.bfloat16)
    Hpc = Hc + K - 1
    Wp = W + K - 1

    kernel = functools.partial(_inception_conv_kernel, TH=TH, W=W, K=K, C_in=C_in, Cop=Cop)

    # Explicit VMEM budget: double-buffered input/output blocks + resident weights + im2col temps.
    est = (2 * Hpc * Wp * C_in * 2            # input block x2 (bf16)
           + 2 * K * K * C_in * Cop * 2       # weights (bf16)
           + 2 * TM * Cop * 4                 # output block x2 (f32)
           + 2 * TM * K * K * C_in * 2        # im2col patch + slack (bf16)
           + TM * Cop * 4)                    # f32 matmul result
    vmem_limit = int(min(max(est * 2, 16 << 20), 48 << 20))

    out = pl.pallas_call(
        kernel,
        out_shape=jax.ShapeDtypeStruct((N, Hc * W, Cop), jnp.float32),
        grid=(N, n_th),
        in_specs=[
            pl.BlockSpec((1, Hpc, Wp, C_in), lambda n, h: (n, 0, 0, 0)),   # resident across h
            pl.BlockSpec((K * K * C_in, Cop), lambda n, h: (0, 0)),        # resident weights
            pl.BlockSpec((1, Cop), lambda n, h: (0, 0)),                   # resident bias
        ],
        out_specs=pl.BlockSpec((1, TM, Cop), lambda n, h: (n, h, 0)),
        compiler_params=pltpu.CompilerParams(
            dimension_semantics=("parallel", "parallel"),
            vmem_limit_bytes=vmem_limit),
    )(x_pad, w_flat, b_pad)

    out = out.reshape(N, Hc, W, Cop)[:, :H, :, :C_out]
    return jnp.transpose(out, (0, 3, 1, 2))                    # back to NCHW


def _reference(x_nchw, weights, biases):
    # Pure-JAX reference: per-branch conv, stack, mean (mirrors the torch module).
    outs = []
    for wi, bi in zip(weights, biases):
        k = wi.shape[-1]
        p = (k - 1) // 2
        o = lax.conv_general_dilated(
            x_nchw, wi, window_strides=(1, 1),
            padding=((p, p), (p, p)),
            dimension_numbers=("NCHW", "OIHW", "NCHW"))
        outs.append(o + bi[None, :, None, None])
    return jnp.mean(jnp.stack(outs, axis=-1), axis=-1)


def _init_params(key, in_channels, out_channels, num_kernels):
    # kaiming_normal_(mode='fan_out', nonlinearity='relu') -> std = sqrt(2 / (C_out*k*k));
    # biases initialized to zero (nn.init.constant_(bias, 0)).
    weights, biases = [], []
    for i in range(num_kernels):
        k = 2 * i + 1
        key, sub = jax.random.split(key)
        std = (2.0 / (out_channels * k * k)) ** 0.5
        w = std * jax.random.normal(sub, (out_channels, in_channels, k, k),
                                    dtype=jnp.float32)
        weights.append(w)
        biases.append(jnp.zeros((out_channels,), jnp.float32))
    return weights, biases


if __name__ == "__main__":
    N, C_in, C_out, H, W = 2, 8, 16, 16, 16
    num_kernels = 6

    key = jax.random.PRNGKey(0)
    key, xkey = jax.random.split(key)
    x = jax.random.normal(xkey, (N, C_in, H, W), dtype=jnp.float32)
    weights, biases = _init_params(key, C_in, C_out, num_kernels)

    # tile_h=8 -> grid (N, 2): exercises the H-tiling path even at this small shape.
    out = inception_block_v1(x, weights, biases, tile_h=8)
    out = jax.block_until_ready(out)

    ref = _reference(x, weights, biases)
    err = float(jnp.max(jnp.abs(out - ref)))
    assert out.shape == (N, C_out, H, W)
    assert err < 1e-2, f"max abs error too large: {err}"

    print("KERNEL_OK")
</pallas_src>

<mosaic_0001>
module attributes {stable_mosaic.version = 11 : i64} {
  func.func @_inception_conv_kernel(%arg0: i32, %arg1: i32, %arg2: memref<1x26x26x8xbf16, #tpu.memory_space<vmem>>, %arg3: memref<968x128xbf16, #tpu.memory_space<vmem>>, %arg4: memref<1x128xf32, #tpu.memory_space<vmem>>, %arg5: memref<1x128x128xf32, #tpu.memory_space<vmem>>) attributes {dimension_semantics = [#tpu.dimension_semantics<parallel>, #tpu.dimension_semantics<parallel>], iteration_bounds = array<i64: 2, 2>, scalar_prefetch = 0 : i64, scratch_operands = 0 : i64, tpu.core_type = #tpu.core_type<tc>, window_params = [{transform_indices = @transform_0, window_bounds = array<i64: 1, 26, 26, 8>}, {pipeline_mode = #tpu.pipeline_mode<synchronous>, transform_indices = @transform_1, window_bounds = array<i64: 968, 128>}, {pipeline_mode = #tpu.pipeline_mode<synchronous>, transform_indices = @transform_2, window_bounds = array<i64: 1, 128>}, {transform_indices = @transform_3, window_bounds = array<i64: 1, 128, 128>}]} {
    %c8_i32 = arith.constant 8 : i32
    %0 = arith.muli %arg1, %c8_i32 : i32
    %c0 = arith.constant 0 : index
    %1 = arith.index_cast %0 : i32 to index
    %c0_0 = arith.constant 0 : index
    %c0_1 = arith.constant 0 : index
    %2 = vector.load %arg2[%c0, %1, %c0_0, %c0_1] : memref<1x26x26x8xbf16, #tpu.memory_space<vmem>>, vector<1x18x26x8xbf16>
    %3 = vector.shape_cast %2 : vector<1x18x26x8xbf16> to vector<18x26x8xbf16>
    %4 = vector.extract_strided_slice %3 {offsets = [0, 0, 0], sizes = [18, 16, 8], strides = [1, 1, 1]} : vector<18x26x8xbf16> to vector<18x16x8xbf16>
    %5 = vector.extract_strided_slice %3 {offsets = [0, 1, 0], sizes = [18, 16, 8], strides = [1, 1, 1]} : vector<18x26x8xbf16> to vector<18x16x8xbf16>
    %6 = vector.extract_strided_slice %3 {offsets = [0, 2, 0], sizes = [18, 16, 8], strides = [1, 1, 1]} : vector<18x26x8xbf16> to vector<18x16x8xbf16>
    %7 = vector.extract_strided_slice %3 {offsets = [0, 3, 0], sizes = [18, 16, 8], strides = [1, 1, 1]} : vector<18x26x8xbf16> to vector<18x16x8xbf16>
    %8 = vector.extract_strided_slice %3 {offsets = [0, 4, 0], sizes = [18, 16, 8], strides = [1, 1, 1]} : vector<18x26x8xbf16> to vector<18x16x8xbf16>
    %9 = vector.extract_strided_slice %3 {offsets = [0, 5, 0], sizes = [18, 16, 8], strides = [1, 1, 1]} : vector<18x26x8xbf16> to vector<18x16x8xbf16>
    %10 = vector.extract_strided_slice %3 {offsets = [0, 6, 0], sizes = [18, 16, 8], strides = [1, 1, 1]} : vector<18x26x8xbf16> to vector<18x16x8xbf16>
    %11 = vector.extract_strided_slice %3 {offsets = [0, 7, 0], sizes = [18, 16, 8], strides = [1, 1, 1]} : vector<18x26x8xbf16> to vector<18x16x8xbf16>
    %12 = vector.extract_strided_slice %3 {offsets = [0, 8, 0], sizes = [18, 16, 8], strides = [1, 1, 1]} : vector<18x26x8xbf16> to vector<18x16x8xbf16>
    %13 = vector.extract_strided_slice %3 {offsets = [0, 9, 0], sizes = [18, 16, 8], strides = [1, 1, 1]} : vector<18x26x8xbf16> to vector<18x16x8xbf16>
    %14 = vector.extract_strided_slice %3 {offsets = [0, 10, 0], sizes = [18, 16, 8], strides = [1, 1, 1]} : vector<18x26x8xbf16> to vector<18x16x8xbf16>
    %15 = tpu.concatenate %4, %5, %6, %7, %8, %9, %10, %11, %12, %13, %14 in 2 : vector<18x16x8xbf16>, vector<18x16x8xbf16>, vector<18x16x8xbf16>, vector<18x16x8xbf16>, vector<18x16x8xbf16>, vector<18x16x8xbf16>, vector<18x16x8xbf16>, vector<18x16x8xbf16>, vector<18x16x8xbf16>, vector<18x16x8xbf16>, vector<18x16x8xbf16> -> vector<18x16x88xbf16>
    %16 = vector.extract_strided_slice %15 {offsets = [0, 0, 0], sizes = [8, 16, 88], strides = [1, 1, 1]} : vector<18x16x88xbf16> to vector<8x16x88xbf16>
    %17 = vector.extract_strided_slice %15 {offsets = [1, 0, 0], sizes = [8, 16, 88], strides = [1, 1, 1]} : vector<18x16x88xbf16> to vector<8x16x88xbf16>
    %18 = vector.extract_strided_slice %15 {offsets = [2, 0, 0], sizes = [8, 16, 88], strides = [1, 1, 1]} : vector<18x16x88xbf16> to vector<8x16x88xbf16>
    %19 = vector.extract_strided_slice %15 {offsets = [3, 0, 0], sizes = [8, 16, 88], strides = [1, 1, 1]} : vector<18x16x88xbf16> to vector<8x16x88xbf16>
    %20 = vector.extract_strided_slice %15 {offsets = [4, 0, 0], sizes = [8, 16, 88], strides = [1, 1, 1]} : vector<18x16x88xbf16> to vector<8x16x88xbf16>
    %21 = vector.extract_strided_slice %15 {offsets = [5, 0, 0], sizes = [8, 16, 88], strides = [1, 1, 1]} : vector<18x16x88xbf16> to vector<8x16x88xbf16>
    %22 = vector.extract_strided_slice %15 {offsets = [6, 0, 0], sizes = [8, 16, 88], strides = [1, 1, 1]} : vector<18x16x88xbf16> to vector<8x16x88xbf16>
    %23 = vector.extract_strided_slice %15 {offsets = [7, 0, 0], sizes = [8, 16, 88], strides = [1, 1, 1]} : vector<18x16x88xbf16> to vector<8x16x88xbf16>
    %24 = vector.extract_strided_slice %15 {offsets = [8, 0, 0], sizes = [8, 16, 88], strides = [1, 1, 1]} : vector<18x16x88xbf16> to vector<8x16x88xbf16>
    %25 = vector.extract_strided_slice %15 {offsets = [9, 0, 0], sizes = [8, 16, 88], strides = [1, 1, 1]} : vector<18x16x88xbf16> to vector<8x16x88xbf16>
    %26 = vector.extract_strided_slice %15 {offsets = [10, 0, 0], sizes = [8, 16, 88], strides = [1, 1, 1]} : vector<18x16x88xbf16> to vector<8x16x88xbf16>
    %27 = tpu.concatenate %16, %17, %18, %19, %20, %21, %22, %23, %24, %25, %26 in 2 : vector<8x16x88xbf16>, vector<8x16x88xbf16>, vector<8x16x88xbf16>, vector<8x16x88xbf16>, vector<8x16x88xbf16>, vector<8x16x88xbf16>, vector<8x16x88xbf16>, vector<8x16x88xbf16>, vector<8x16x88xbf16>, vector<8x16x88xbf16>, vector<8x16x88xbf16> -> vector<8x16x968xbf16>
    %28 = vector.shape_cast %27 : vector<8x16x968xbf16> to vector<128x968xbf16>
    %c0_2 = arith.constant 0 : index
    %c0_3 = arith.constant 0 : index
    %29 = vector.load %arg3[%c0_2, %c0_3] : memref<968x128xbf16, #tpu.memory_space<vmem>>, vector<968x128xbf16>
    %cst = arith.constant dense<0.000000e+00> : vector<128x128xf32>
    %30 = tpu.matmul %28, %29, %cst {dimension_numbers = #tpu.dot_dimension_numbers<[1], [0], [0], [1], [0, 0, 1, 1], [], []>} : vector<128x968xbf16>, vector<968x128xbf16>, vector<128x128xf32> -> vector<128x128xf32>
    %c0_4 = arith.constant 0 : index
    %c0_5 = arith.constant 0 : index
    %31 = vector.load %arg4[%c0_4, %c0_5] : memref<1x128xf32, #tpu.memory_space<vmem>>, vector<1x128xf32>
    %32 = vector.broadcast %31 : vector<1x128xf32> to vector<128x128xf32>
    %33 = arith.addf %30, %32 : vector<128x128xf32>
    %c0_6 = arith.constant 0 : index
    %c0_7 = arith.constant 0 : index
    %c0_8 = arith.constant 0 : index
    %34 = vector.load %arg5[%c0_6, %c0_7, %c0_8] : memref<1x128x128xf32, #tpu.memory_space<vmem>>, vector<1x128x128xf32>
    %35 = vector.shape_cast %34 : vector<1x128x128xf32> to vector<128x128xf32>
    %36 = vector.shape_cast %33 : vector<128x128xf32> to vector<1x128x128xf32>
    tpu.vector_store %arg5[%c0_6, %c0_7, %c0_8], %36 {strides = array<i32>} : memref<1x128x128xf32, #tpu.memory_space<vmem>>, vector<1x128x128xf32>,
    return
  }
  func.func @transform_0(%arg0: i32, %arg1: i32) -> (i32, i32, i32, i32) {
    %c0_i32 = arith.constant 0 : i32
    %c0_i32_0 = arith.constant 0 : i32
    %c0_i32_1 = arith.constant 0 : i32
    %c0_i32_2 = arith.constant 0 : i32
    return %arg0, %c0_i32, %c0_i32_0, %c0_i32_1 : i32, i32, i32, i32
  }
  func.func @transform_1(%arg0: i32, %arg1: i32) -> (i32, i32) {
    %c0_i32 = arith.constant 0 : i32
    %c0_i32_0 = arith.constant 0 : i32
    %c0_i32_1 = arith.constant 0 : i32
    return %c0_i32, %c0_i32_0 : i32, i32
  }
  func.func @transform_2(%arg0: i32, %arg1: i32) -> (i32, i32) {
    %c0_i32 = arith.constant 0 : i32
    %c0_i32_0 = arith.constant 0 : i32
    %c0_i32_1 = arith.constant 0 : i32
    return %c0_i32, %c0_i32_0 : i32, i32
  }
  func.func @transform_3(%arg0: i32, %arg1: i32) -> (i32, i32, i32) {
    %c0_i32 = arith.constant 0 : i32
    %c0_i32_0 = arith.constant 0 : i32
    return %arg0, %arg1, %c0_i32 : i32, i32, i32
  }
}

</mosaic_0001>

<llo_original>
// kernel: tpu_custom_call.1
$region0: #{tpu_custom_call.1}
  #allocation0 [shape = 'u32[]', space=smem, size = 0x4, offset = 0x4, fixed_abs, tag = 'smem constant byte address 0x4 - core index']
  #allocation1 [shape = 'u32[144,128]{1,0:T(1,128)}', space=vmem, size = 0x12000, scoped, tag = 'internal scratch']
  %s0 = inlined_call_operand.vmem [shape: bf16[2,26,26,8], index: 0, kind: input, shape index: {}]
  %s1 = inlined_call_operand.vmem [shape: bf16[968,128], index: 1, kind: input, shape index: {}]
  %s2 = inlined_call_operand.vmem [shape: f32[1,128], index: 2, kind: input, shape index: {}]
  %s3 = inlined_call_operand.hbm [shape: f32[2,256,128], index: 3, kind: output, shape index: {}]
  %s4 = sld [smem:[#allocation0]]
  $region45: #{tpu_custom_call.1} parent=0
    _
  %s6 = ssub.s32 1, %s4
  %s7 = scalar_select 0, %s6, %s4
  $region1: #{tpu_custom_call.1} parent=0
    #allocation2 [shape = 'u8[131072]{0}', space=vmem, size = 0x20000, scoped, tag = 'output window, operand 0']
    #allocation3 [shape = 's32[2]{0}', space=sflag, size = 0x8, scoped, tag = 'scoped memory for tpu_custom_call.1']
    %8 = vsyncpa [#allocation3], 0
    %s9 = scalar_lea.sflag [#allocation3], 1
    %10 = vsyncpa %s9, 0
    loop: start=0, step=1, limit=6
    $region2: #{tpu_custom_call.1} parent=1 // loop_pre_header
      _
    $region3: #{tpu_custom_call.1} parent=1 // loop_header
      %s12 = sphi 0, %s16
      %p13 = scmp.ge.s32.totalorder %s12, 6
      %s19 = sphi 0, %s31
      %s20 = sphi 0, %s27
      %s21 = sphi 0, %s19
      %s22 = sphi 0, %s20
      %s23 = sphi 0, %s21
      %s24 = sphi 0, %s22
      %s34 = sphi 0, %s36
      %s37 = sphi 0, %s34
      %s38 = sphi 0, %s37
      %s54 = sphi 0, %s38
      %s58 = sphi 0, %s58
      %s60 = sphi 0, %s58
      %s61 = sphi 0, %s60
      %s75 = sphi 0, %s61
      %s79 = sphi 0, %s79
      %s81 = sphi 0, %s79
      %s82 = sphi 0, %s81
      %s96 = sphi 0, %s82
      %s104 = sphi 0, %s106
      %s107 = sphi 0, %s104
      %s108 = sphi 0, %s107
      %s124 = sphi 0, %s108
    $region4: #{tpu_custom_call.1} parent=1 // loop_header_branch
      %15 = sbr.rel (%p13) target = $region8
    $region5: #{tpu_custom_call.1} parent=1 // loop_body
      %s17 = ssub.s32 %s12, 1
      %s18 = ssub.s32 %s12, 2
      %s25 = sadd.s32 1, %s20
      %p26 = scmp.ge.s32.totalorder %s25, 2
      %s27 = scalar_select %p26, 0, %s25
      %s28 = sadd.s32 1, %s19
      %s29 = scalar_select %p26, %s28, %s19
      %p30 = scmp.ge.s32.totalorder %s29, 2
      %s31 = scalar_select %p30, 0, %s29
      %s32 = ssub.s32 %s19, %s31
      %p33 = scmp.eq.s32.totalorder %s32, 0
      %s35 = sadd.s32 %s34, 1
      %s36 = scalar_select %p33, %s34, %s35
      %p39 = pneg %p33
      %p40 = scmp.eq.s32.totalorder %s12, 3
      %p41 = por %p39, %p40
      %p42 = scmp.ne.s32.totalorder %s34, %s37
      %p43 = scmp.eq.s32.totalorder %s12, 0
      %p44 = por %p42, %p43
      %p45 = scmp.ne.s32.totalorder %s34, %s37
      %p46 = scmp.eq.s32.totalorder %s17, 3
      %p47 = por %p45, %p46
      %p48 = scmp.ne.s32.totalorder %s37, %s38
      %p49 = scmp.eq.s32.totalorder %s17, 0
      %p50 = por %p48, %p49
      %p51 = scmp.ne.s32.totalorder %s37, %s38
      %p52 = scmp.eq.s32.totalorder %s18, 3
      %p53 = por %p51, %p52
      %p55 = scmp.ne.s32.totalorder %s38, %s54
      %p56 = scmp.eq.s32.totalorder %s18, 0
      %p57 = por %p55, %p56
      %s59 = sadd.s32 %s58, 1
      %p62 = scmp.eq.s32.totalorder %s12, 3
      %p63 = scmp.ne.s32.totalorder %s58, %s60
      %p64 = scmp.eq.s32.totalorder %s12, 0
      %p65 = por %p63, %p64
      %p66 = scmp.ne.s32.totalorder %s58, %s60
      %p67 = scmp.eq.s32.totalorder %s17, 3
      %p68 = por %p66, %p67
      %p69 = scmp.ne.s32.totalorder %s60, %s61
      %p70 = scmp.eq.s32.totalorder %s17, 0
      %p71 = por %p69, %p70
      %p72 = scmp.ne.s32.totalorder %s60, %s61
      %p73 = scmp.eq.s32.totalorder %s18, 3
      %p74 = por %p72, %p73
      %p76 = scmp.ne.s32.totalorder %s61, %s75
      %p77 = scmp.eq.s32.totalorder %s18, 0
      %p78 = por %p76, %p77
      %s80 = sadd.s32 %s79, 1
      %p83 = scmp.eq.s32.totalorder %s12, 3
      %p84 = scmp.ne.s32.totalorder %s79, %s81
      %p85 = scmp.eq.s32.totalorder %s12, 0
      %p86 = por %p84, %p85
      %p87 = scmp.ne.s32.totalorder %s79, %s81
      %p88 = scmp.eq.s32.totalorder %s17, 3
      %p89 = por %p87, %p88
      %p90 = scmp.ne.s32.totalorder %s81, %s82
      %p91 = scmp.eq.s32.totalorder %s17, 0
      %p92 = por %p90, %p91
      %p93 = scmp.ne.s32.totalorder %s81, %s82
      %p94 = scmp.eq.s32.totalorder %s18, 3
      %p95 = por %p93, %p94
      %p97 = scmp.ne.s32.totalorder %s82, %s96
      %p98 = scmp.eq.s32.totalorder %s18, 0
      %p99 = por %p97, %p98
      %s100 = ssub.s32 %s19, %s31
      %s101 = ssub.s32 %s20, %s27
      %s102 = sor.u32 %s100, %s101
      %p103 = scmp.eq.s32.totalorder %s102, 0
      %s105 = sadd.s32 %s104, 1
      %s106 = scalar_select %p103, %s104, %s105
      %p109 = pneg %p103
      %p110 = scmp.eq.s32.totalorder %s12, 3
      %p111 = por %p109, %p110
      %p112 = scmp.ne.s32.totalorder %s104, %s107
      %p113 = scmp.eq.s32.totalorder %s12, 0
      %p114 = por %p112, %p113
      %p115 = scmp.ne.s32.totalorder %s104, %s107
      %p116 = scmp.eq.s32.totalorder %s17, 3
      %p117 = por %p115, %p116
      %p118 = scmp.ne.s32.totalorder %s107, %s108
      %p119 = scmp.eq.s32.totalorder %s17, 0
      %p120 = por %p118, %p119
      %p121 = scmp.ne.s32.totalorder %s107, %s108
      %p122 = scmp.eq.s32.totalorder %s18, 3
      %p123 = por %p121, %p122
      %p125 = scmp.ne.s32.totalorder %s108, %s124
      %p126 = scmp.eq.s32.totalorder %s18, 0
      %p127 = por %p125, %p126
      %p128 = scmp.le.s32.totalorder 1, %s12
      %p129 = scmp.lt.s32.totalorder %s12, 5
      %p130 = pnand %p128, %p129
      %p131 = pneg %p130
      // Predicated region
      $region9: #{tpu_custom_call.1} parent=5 // pred_check
        _
      $region10: #{tpu_custom_call.1} parent=5 // pred_check_branch
        %133 = sbr.rel (%p130) target = $region12
      $region11: #{tpu_custom_call.1} parent=5 // pred_region
        %s134 = ssub.s32 %s12, 1
        // Predicated region
        $region13: #{tpu_custom_call.1} parent=11 // pred_check
          %p135 = pneg %p71
        $region14: #{tpu_custom_call.1} parent=11 // pred_check_branch
          %137 = sbr.rel (%p135) target = $region16
        $region15: #{tpu_custom_call.1} parent=11 // pred_region
          _
        $region16: #{tpu_custom_call.1} parent=11 // pred_fallthru
          _
        // Predicated region
        $region17: #{tpu_custom_call.1} parent=11 // pred_check
          %p138 = pneg %p92
        $region18: #{tpu_custom_call.1} parent=11 // pred_check_branch
          %140 = sbr.rel (%p138) target = $region20
        $region19: #{tpu_custom_call.1} parent=11 // pred_region
          _
        $region20: #{tpu_custom_call.1} parent=11 // pred_fallthru
          _
      $region12: #{tpu_custom_call.1} parent=5 // pred_fallthru
        _
      %p141 = scmp.lt.s32.totalorder %s12, 4
      // Predicated region
      $region21: #{tpu_custom_call.1} parent=5 // pred_check
        %p142 = pneg %p141
      $region22: #{tpu_custom_call.1} parent=5 // pred_check_branch
        %144 = sbr.rel (%p142) target = $region24
      $region23: #{tpu_custom_call.1} parent=5 // pred_region
        // Predicated region
        $region25: #{tpu_custom_call.1} parent=23 // pred_check
          %p145 = pneg %p44
        $region26: #{tpu_custom_call.1} parent=23 // pred_check_branch
          %147 = sbr.rel (%p145) target = $region28
        $region27: #{tpu_custom_call.1} parent=23 // pred_region
          %p148 = scmp.lt.s32.totalorder %s19, 1
          %s149 = scalar_select %p148, %s19, 1
          %s150 = smul.addr %s149, 104
          %s151 = smul.addr %s150, 4
          %s152 = scalar_lea.vmem %s0, %s151
        $region28: #{tpu_custom_call.1} parent=23 // pred_fallthru
          _
      $region24: #{tpu_custom_call.1} parent=5 // pred_fallthru
        _
      %p153 = scmp.le.s32.totalorder 1, %s12
      %p154 = scmp.lt.s32.totalorder %s12, 5
      %p155 = pnand %p153, %p154
      %p156 = pneg %p155
      // Predicated region
      $region29: #{tpu_custom_call.1} parent=5 // pred_check
        _
      $region30: #{tpu_custom_call.1} parent=5 // pred_check_branch
        %158 = sbr.rel (%p155) target = $region32
      $region31: #{tpu_custom_call.1} parent=5 // pred_region
        %s159 = ssub.s32 %s12, 1
        %p160 = scmp.lt.s32.totalorder %s21, 1
        %s161 = scalar_select %p160, %s21, 1
        %s162 = smul.addr %s161, 104
        %s163 = smul.addr %s162, 4
        %s164 = scalar_lea.vmem %s0, %s163
        %p165 = pneg %p50
        %p166 = pneg %p47
        %p167 = pneg %p71
        %p168 = pneg %p68
        %p169 = pneg %p92
        %p170 = pneg %p89
        %p171 = pneg %p120
        %p172 = pneg %p117
        %s173 = sand.u32 %s107, 1
        %s174 = scalar_lea.sflag [#allocation3], %s173
        %s175 = sand.u32 %s107, 1
        %s176 = smul.addr %s175, 128
        %s177 = scalar_lea.vmem [#allocation2], %s176
        %p178 = scmp.lt.s32.totalorder %s21, 1
        %s179 = scalar_select %p178, %s21, 1
        %s180 = smul.addr %s179, 104
        %s181 = smul.addr %s180, 4
        %s182 = scalar_lea.vmem %s0, %s181
        %s183 = smul.u32 16, %s22
        %s185 = smul.u32 %s22, 8
        %s186 = smul.u32 %s185, 4
        %s187 = smul.addr %s186, 4
        %s188 = scalar_lea.vmem %s182, %s187
        %v189 = vld [vmem:[%s188] sm:$0xf]
        %v190 = vld [vmem:[%s188 + $0x4] sm:$0xf]
        %v191 = vld [vmem:[%s188 + $0x8] sm:$0xf]
        %v192 = vld [vmem:[%s188 + $0xc] sm:$0x1]
        %v193 = vld [vmem:[%s188 + $0x10] sm:$0xf]
        %v194 = vld [vmem:[%s188 + $0x14] sm:$0xf]
        %v195 = vld [vmem:[%s188 + $0x18] sm:$0xf]
        %v196 = vld [vmem:[%s188 + $0x1c] sm:$0x1]
        %v197 = vld [vmem:[%s188 + $0x20] sm:$0xf]
        %v198 = vld [vmem:[%s188 + $0x24] sm:$0xf]
        %v199 = vld [vmem:[%s188 + $0x28] sm:$0xf]
        %v200 = vld [vmem:[%s188 + $0x2c] sm:$0x1]
        %v201 = vld [vmem:[%s188 + $0x30] sm:$0xf]
        %v202 = vld [vmem:[%s188 + $0x34] sm:$0xf]
        %v203 = vld [vmem:[%s188 + $0x38] sm:$0xf]
        %v204 = vld [vmem:[%s188 + $0x3c] sm:$0x1]
        %v205 = vld [vmem:[%s188 + $0x40] sm:$0xf]
        %v206 = vld [vmem:[%s188 + $0x44] sm:$0xf]
        %v207 = vld [vmem:[%s188 + $0x48] sm:$0xf]
        %v208 = vld [vmem:[%s188 + $0x4c] sm:$0x1]
        %v209 = vld [vmem:[%s188 + $0x50] sm:$0xf]
        %v210 = vld [vmem:[%s188 + $0x54] sm:$0xf]
        %v211 = vld [vmem:[%s188 + $0x58] sm:$0xf]
        %v212 = vld [vmem:[%s188 + $0x5c] sm:$0x1]
        %v213 = vld [vmem:[%s188 + $0x60] sm:$0xf]
        %v214 = vld [vmem:[%s188 + $0x64] sm:$0xf]
        %v215 = vld [vmem:[%s188 + $0x68] sm:$0xf]
        %v216 = vld [vmem:[%s188 + $0x6c] sm:$0x1]
        %v217 = vld [vmem:[%s188 + $0x70] sm:$0xf]
        %v218 = vld [vmem:[%s188 + $0x74] sm:$0xf]
        %v219 = vld [vmem:[%s188 + $0x78] sm:$0xf]
        %v220 = vld [vmem:[%s188 + $0x7c] sm:$0x1]
        %v221 = vld [vmem:[%s188 + $0x80] sm:$0xf]
        %v222 = vld [vmem:[%s188 + $0x84] sm:$0xf]
        %v223 = vld [vmem:[%s188 + $0x88] sm:$0xf]
        %v224 = vld [vmem:[%s188 + $0x8c] sm:$0x1]
        %v225 = vld [vmem:[%s188 + $0x90] sm:$0xf]
        %v226 = vld [vmem:[%s188 + $0x94] sm:$0xf]
        %v227 = vld [vmem:[%s188 + $0x98] sm:$0xf]
        %v228 = vld [vmem:[%s188 + $0x9c] sm:$0x1]
        %v229 = vld [vmem:[%s188 + $0xa0] sm:$0xf]
        %v230 = vld [vmem:[%s188 + $0xa4] sm:$0xf]
        %v231 = vld [vmem:[%s188 + $0xa8] sm:$0xf]
        %v232 = vld [vmem:[%s188 + $0xac] sm:$0x1]
        %v233 = vld [vmem:[%s188 + $0xb0] sm:$0xf]
        %v234 = vld [vmem:[%s188 + $0xb4] sm:$0xf]
        %v235 = vld [vmem:[%s188 + $0xb8] sm:$0xf]
        %v236 = vld [vmem:[%s188 + $0xbc] sm:$0x1]
        %v237 = vld [vmem:[%s188 + $0xc0] sm:$0xf]
        %v238 = vld [vmem:[%s188 + $0xc4] sm:$0xf]
        %v239 = vld [vmem:[%s188 + $0xc8] sm:$0xf]
        %v240 = vld [vmem:[%s188 + $0xcc] sm:$0x1]
        %v241 = vld [vmem:[%s188 + $0xd0] sm:$0xf]
        %v242 = vld [vmem:[%s188 + $0xd4] sm:$0xf]
        %v243 = vld [vmem:[%s188 + $0xd8] sm:$0xf]
        %v244 = vld [vmem:[%s188 + $0xdc] sm:$0x1]
        %v245 = vld [vmem:[%s188 + $0xe0] sm:$0xf]
        %v246 = vld [vmem:[%s188 + $0xe4] sm:$0xf]
        %v247 = vld [vmem:[%s188 + $0xe8] sm:$0xf]
        %v248 = vld [vmem:[%s188 + $0xec] sm:$0x1]
        %v249 = vld [vmem:[%s188 + $0xf0] sm:$0xf]
        %v250 = vld [vmem:[%s188 + $0xf4] sm:$0xf]
        %v251 = vld [vmem:[%s188 + $0xf8] sm:$0xf]
        %v252 = vld [vmem:[%s188 + $0xfc] sm:$0x1]
        %v253 = vld [vmem:[%s188 + $0x100] sm:$0xf]
        %v254 = vld [vmem:[%s188 + $0x104] sm:$0xf]
        %v255 = vld [vmem:[%s188 + $0x108] sm:$0xf]
        %v256 = vld [vmem:[%s188 + $0x10c] sm:$0x1]
        %v257 = vld [vmem:[%s188 + $0x110] sm:$0xf]
        %v258 = vld [vmem:[%s188 + $0x114] sm:$0xf]
        %v259 = vld [vmem:[%s188 + $0x118] sm:$0xf]
        %v260 = vld [vmem:[%s188 + $0x11c] sm:$0x1]
        %v297 = vunpack.c.l.b16 %v189
        %v298 = vunpack.c.l.b16 %v190
        %v299 = vunpack.c.l.b16 %v193
        %v300 = vunpack.c.l.b16 %v194
        %v301 = vunpack.c.l.b16 %v197
        %v302 = vunpack.c.l.b16 %v198
        %v303 = vunpack.c.l.b16 %v201
        %v304 = vunpack.c.l.b16 %v202
        %v305 = vunpack.c.l.b16 %v205
        %v306 = vunpack.c.l.b16 %v206
        %v307 = vunpack.c.l.b16 %v209
        %v308 = vunpack.c.l.b16 %v210
        %v309 = vunpack.c.l.b16 %v213
        %v310 = vunpack.c.l.b16 %v214
        %v311 = vunpack.c.l.b16 %v217
        %v312 = vunpack.c.l.b16 %v218
        %v313 = vunpack.c.l.b16 %v221
        %v314 = vunpack.c.l.b16 %v222
        %v315 = vunpack.c.l.b16 %v225
        %v316 = vunpack.c.l.b16 %v226
        %v317 = vunpack.c.l.b16 %v229
        %v318 = vunpack.c.l.b16 %v230
        %v319 = vunpack.c.l.b16 %v233
        %v320 = vunpack.c.l.b16 %v234
        %v321 = vunpack.c.l.b16 %v237
        %v322 = vunpack.c.l.b16 %v238
        %v323 = vunpack.c.l.b16 %v241
        %v324 = vunpack.c.l.b16 %v242
        %v325 = vunpack.c.l.b16 %v245
        %v326 = vunpack.c.l.b16 %v246
        %v327 = vunpack.c.l.b16 %v249
        %v328 = vunpack.c.l.b16 %v250
        %v329 = vunpack.c.l.b16 %v253
        %v330 = vunpack.c.l.b16 %v254
        %v331 = vunpack.c.l.b16 %v257
        %v332 = vunpack.c.l.b16 %v258
        %v333 = vpack.c.b16 %v298, %v297
        %v334 = vpack.c.b16 %v300, %v299
        %v335 = vpack.c.b16 %v302, %v301
        %v336 = vpack.c.b16 %v304, %v303
        %v337 = vpack.c.b16 %v306, %v305
        %v338 = vpack.c.b16 %v308, %v307
        %v339 = vpack.c.b16 %v310, %v309
        %v340 = vpack.c.b16 %v312, %v311
        %v341 = vpack.c.b16 %v314, %v313
        %v342 = vpack.c.b16 %v316, %v315
        %v343 = vpack.c.b16 %v318, %v317
        %v344 = vpack.c.b16 %v320, %v319
        %v345 = vpack.c.b16 %v322, %v321
        %v346 = vpack.c.b16 %v324, %v323
        %v347 = vpack.c.b16 %v326, %v325
        %v348 = vpack.c.b16 %v328, %v327
        %v349 = vpack.c.b16 %v330, %v329
        %v350 = vpack.c.b16 %v332, %v331
        %v369 = vunpack.c.l.b16 %v191
        %v370 = vunpack.c.l.b16 %v195
        %v371 = vunpack.c.l.b16 %v199
        %v372 = vunpack.c.l.b16 %v203
        %v373 = vunpack.c.l.b16 %v207
        %v374 = vunpack.c.l.b16 %v211
        %v375 = vunpack.c.l.b16 %v215
        %v376 = vunpack.c.l.b16 %v219
        %v377 = vunpack.c.l.b16 %v223
        %v378 = vunpack.c.l.b16 %v227
        %v379 = vunpack.c.l.b16 %v231
        %v380 = vunpack.c.l.b16 %v235
        %v381 = vunpack.c.l.b16 %v239
        %v382 = vunpack.c.l.b16 %v243
        %v383 = vunpack.c.l.b16 %v247
        %v384 = vunpack.c.l.b16 %v251
        %v385 = vunpack.c.l.b16 %v255
        %v386 = vunpack.c.l.b16 %v259
        %v387 = vpack.c.b16 %v369, %v369
        %v388 = vpack.c.b16 %v370, %v370
        %v389 = vpack.c.b16 %v371, %v371
        %v390 = vpack.c.b16 %v372, %v372
        %v391 = vpack.c.b16 %v373, %v373
        %v392 = vpack.c.b16 %v374, %v374
        %v393 = vpack.c.b16 %v375, %v375
        %v394 = vpack.c.b16 %v376, %v376
        %v395 = vpack.c.b16 %v377, %v377
        %v396 = vpack.c.b16 %v378, %v378
        %v397 = vpack.c.b16 %v379, %v379
        %v398 = vpack.c.b16 %v380, %v380
        %v399 = vpack.c.b16 %v381, %v381
        %v400 = vpack.c.b16 %v382, %v382
        %v401 = vpack.c.b16 %v383, %v383
        %v402 = vpack.c.b16 %v384, %v384
        %v403 = vpack.c.b16 %v385, %v385
        %v404 = vpack.c.b16 %v386, %v386
        %vm405 = vsmask.f32 7424
        %v407 = vshrl.u32 %v333, 16
        %v409 = vshll.u32 %v333, 16
        %v411 = vrot.slane %v409, 1
        %v412 = vor.u32 %v407, %v411
        %v414 = vshll.u32 %v387, 16
        %v416 = vrot.slane %v414, 1
        %v417 = vsel %vm405, %v412, %v416
        %v419 = vshrl.u32 %v334, 16
        %v421 = vshll.u32 %v334, 16
        %v423 = vrot.slane %v421, 1
        %v424 = vor.u32 %v419, %v423
        %v426 = vshll.u32 %v388, 16
        %v428 = vrot.slane %v426, 1
        %v429 = vsel %vm405, %v424, %v428
        %v431 = vshrl.u32 %v335, 16
        %v433 = vshll.u32 %v335, 16
        %v435 = vrot.slane %v433, 1
        %v436 = vor.u32 %v431, %v435
        %v438 = vshll.u32 %v389, 16
        %v440 = vrot.slane %v438, 1
        %v441 = vsel %vm405, %v436, %v440
        %v443 = vshrl.u32 %v336, 16
        %v445 = vshll.u32 %v336, 16
        %v447 = vrot.slane %v445, 1
        %v448 = vor.u32 %v443, %v447
        %v450 = vshll.u32 %v390, 16
        %v452 = vrot.slane %v450, 1
        %v453 = vsel %vm405, %v448, %v452
        %v455 = vshrl.u32 %v337, 16
        %v457 = vshll.u32 %v337, 16
        %v459 = vrot.slane %v457, 1
        %v460 = vor.u32 %v455, %v459
        %v462 = vshll.u32 %v391, 16
        %v464 = vrot.slane %v462, 1
        %v465 = vsel %vm405, %v460, %v464
        %v467 = vshrl.u32 %v338, 16
        %v469 = vshll.u32 %v338, 16
        %v471 = vrot.slane %v469, 1
        %v472 = vor.u32 %v467, %v471
        %v474 = vshll.u32 %v392, 16
        %v476 = vrot.slane %v474, 1
        %v477 = vsel %vm405, %v472, %v476
        %v479 = vshrl.u32 %v339, 16
        %v481 = vshll.u32 %v339, 16
        %v483 = vrot.slane %v481, 1
        %v484 = vor.u32 %v479, %v483
        %v486 = vshll.u32 %v393, 16
        %v488 = vrot.slane %v486, 1
        %v489 = vsel %vm405, %v484, %v488
        %v491 = vshrl.u32 %v340, 16
        %v493 = vshll.u32 %v340, 16
        %v495 = vrot.slane %v493, 1
        %v496 = vor.u32 %v491, %v495
        %v498 = vshll.u32 %v394, 16
        %v500 = vrot.slane %v498, 1
        %v501 = vsel %vm405, %v496, %v500
        %v503 = vshrl.u32 %v341, 16
        %v505 = vshll.u32 %v341, 16
        %v507 = vrot.slane %v505, 1
        %v508 = vor.u32 %v503, %v507
        %v510 = vshll.u32 %v395, 16
        %v512 = vrot.slane %v510, 1
        %v513 = vsel %vm405, %v508, %v512
        %v515 = vshrl.u32 %v342, 16
        %v517 = vshll.u32 %v342, 16
        %v519 = vrot.slane %v517, 1
        %v520 = vor.u32 %v515, %v519
        %v522 = vshll.u32 %v396, 16
        %v524 = vrot.slane %v522, 1
        %v525 = vsel %vm405, %v520, %v524
        %v527 = vshrl.u32 %v343, 16
        %v529 = vshll.u32 %v343, 16
        %v531 = vrot.slane %v529, 1
        %v532 = vor.u32 %v527, %v531
        %v534 = vshll.u32 %v397, 16
        %v536 = vrot.slane %v534, 1
        %v537 = vsel %vm405, %v532, %v536
        %v539 = vshrl.u32 %v344, 16
        %v541 = vshll.u32 %v344, 16
        %v543 = vrot.slane %v541, 1
        %v544 = vor.u32 %v539, %v543
        %v546 = vshll.u32 %v398, 16
        %v548 = vrot.slane %v546, 1
        %v549 = vsel %vm405, %v544, %v548
        %v551 = vshrl.u32 %v345, 16
        %v553 = vshll.u32 %v345, 16
        %v555 = vrot.slane %v553, 1
        %v556 = vor.u32 %v551, %v555
        %v558 = vshll.u32 %v399, 16
        %v560 = vrot.slane %v558, 1
        %v561 = vsel %vm405, %v556, %v560
        %v563 = vshrl.u32 %v346, 16
        %v565 = vshll.u32 %v346, 16
        %v567 = vrot.slane %v565, 1
        %v568 = vor.u32 %v563, %v567
        %v570 = vshll.u32 %v400, 16
        %v572 = vrot.slane %v570, 1
        %v573 = vsel %vm405, %v568, %v572
        %v575 = vshrl.u32 %v347, 16
        %v577 = vshll.u32 %v347, 16
        %v579 = vrot.slane %v577, 1
        %v580 = vor.u32 %v575, %v579
        %v582 = vshll.u32 %v401, 16
        %v584 = vrot.slane %v582, 1
        %v585 = vsel %vm405, %v580, %v584
        %v587 = vshrl.u32 %v348, 16
        %v589 = vshll.u32 %v348, 16
        %v591 = vrot.slane %v589, 1
        %v592 = vor.u32 %v587, %v591
        %v594 = vshll.u32 %v402, 16
        %v596 = vrot.slane %v594, 1
        %v597 = vsel %vm405, %v592, %v596
        %v599 = vshrl.u32 %v349, 16
        %v601 = vshll.u32 %v349, 16
        %v603 = vrot.slane %v601, 1
        %v604 = vor.u32 %v599, %v603
        %v606 = vshll.u32 %v403, 16
        %v608 = vrot.slane %v606, 1
        %v609 = vsel %vm405, %v604, %v608
        %v611 = vshrl.u32 %v350, 16
        %v613 = vshll.u32 %v350, 16
        %v615 = vrot.slane %v613, 1
        %v616 = vor.u32 %v611, %v615
        %v618 = vshll.u32 %v404, 16
        %v620 = vrot.slane %v618, 1
        %v621 = vsel %vm405, %v616, %v620
        %622 = vrot.lane.b32.xlu0 %v417, 8
        %v623 = vpop.permute.xlu0 %622
        %624 = vrot.lane.b32.xlu0 %v429, 8
        %v625 = vpop.permute.xlu0 %624
        %626 = vrot.lane.b32.xlu0 %v441, 8
        %v627 = vpop.permute.xlu0 %626
        %628 = vrot.lane.b32.xlu0 %v453, 8
        %v629 = vpop.permute.xlu0 %628
        %630 = vrot.lane.b32.xlu0 %v465, 8
        %v631 = vpop.permute.xlu0 %630
        %632 = vrot.lane.b32.xlu0 %v477, 8
        %v633 = vpop.permute.xlu0 %632
        %634 = vrot.lane.b32.xlu0 %v489, 8
        %v635 = vpop.permute.xlu0 %634
        %636 = vrot.lane.b32.xlu0 %v501, 8
        %v637 = vpop.permute.xlu0 %636
        %638 = vrot.lane.b32.xlu0 %v513, 8
        %v639 = vpop.permute.xlu0 %638
        %640 = vrot.lane.b32.xlu0 %v525, 8
        %v641 = vpop.permute.xlu0 %640
        %642 = vrot.lane.b32.xlu0 %v537, 8
        %v643 = vpop.permute.xlu0 %642
        %644 = vrot.lane.b32.xlu0 %v549, 8
        %v645 = vpop.permute.xlu0 %644
        %646 = vrot.lane.b32.xlu0 %v561, 8
        %v647 = vpop.permute.xlu0 %646
        %648 = vrot.lane.b32.xlu0 %v573, 8
        %v649 = vpop.permute.xlu0 %648
        %650 = vrot.lane.b32.xlu0 %v585, 8
        %v651 = vpop.permute.xlu0 %650
        %652 = vrot.lane.b32.xlu0 %v597, 8
        %v653 = vpop.permute.xlu0 %652
        %654 = vrot.lane.b32.xlu0 %v609, 8
        %v655 = vpop.permute.xlu0 %654
        %656 = vrot.lane.b32.xlu0 %v621, 8
        %v657 = vpop.permute.xlu0 %656
        %vm658 = vcmask 1046528
        %v659 = vrot.slane %v333, 1
        %v660 = vrot.slane %v387, 1
        %v661 = vsel %vm658, %v659, %v660
        %v662 = vrot.slane %v334, 1
        %v663 = vrot.slane %v388, 1
        %v664 = vsel %vm658, %v662, %v663
        %v665 = vrot.slane %v335, 1
        %v666 = vrot.slane %v389, 1
        %v667 = vsel %vm658, %v665, %v666
        %v668 = vrot.slane %v336, 1
        %v669 = vrot.slane %v390, 1
        %v670 = vsel %vm658, %v668, %v669
        %v671 = vrot.slane %v337, 1
        %v672 = vrot.slane %v391, 1
        %v673 = vsel %vm658, %v671, %v672
        %v674 = vrot.slane %v338, 1
        %v675 = vrot.slane %v392, 1
        %v676 = vsel %vm658, %v674, %v675
        %v677 = vrot.slane %v339, 1
        %v678 = vrot.slane %v393, 1
        %v679 = vsel %vm658, %v677, %v678
        %v680 = vrot.slane %v340, 1
        %v681 = vrot.slane %v394, 1
        %v682 = vsel %vm658, %v680, %v681
        %v683 = vrot.slane %v341, 1
        %v684 = vrot.slane %v395, 1
        %v685 = vsel %vm658, %v683, %v684
        %v686 = vrot.slane %v342, 1
        %v687 = vrot.slane %v396, 1
        %v688 = vsel %vm658, %v686, %v687
        %v689 = vrot.slane %v343, 1
        %v690 = vrot.slane %v397, 1
        %v691 = vsel %vm658, %v689, %v690
        %v692 = vrot.slane %v344, 1
        %v693 = vrot.slane %v398, 1
        %v694 = vsel %vm658, %v692, %v693
        %v695 = vrot.slane %v345, 1
        %v696 = vrot.slane %v399, 1
        %v697 = vsel %vm658, %v695, %v696
        %v698 = vrot.slane %v346, 1
        %v699 = vrot.slane %v400, 1
        %v700 = vsel %vm658, %v698, %v699
        %v701 = vrot.slane %v347, 1
        %v702 = vrot.slane %v401, 1
        %v703 = vsel %vm658, %v701, %v702
        %v704 = vrot.slane %v348, 1
        %v705 = vrot.slane %v402, 1
        %v706 = vsel %vm658, %v704, %v705
        %v707 = vrot.slane %v349, 1
        %v708 = vrot.slane %v403, 1
        %v709 = vsel %vm658, %v707, %v708
        %v710 = vrot.slane %v350, 1
        %v711 = vrot.slane %v404, 1
        %v712 = vsel %vm658, %v710, %v711
        %713 = vrot.lane.b32.xlu0 %v661, 16
        %v714 = vpop.permute.xlu0 %713
        %715 = vrot.lane.b32.xlu0 %v664, 16
        %v716 = vpop.permute.xlu0 %715
        %717 = vrot.lane.b32.xlu0 %v667, 16
        %v718 = vpop.permute.xlu0 %717
        %719 = vrot.lane.b32.xlu0 %v670, 16
        %v720 = vpop.permute.xlu0 %719
        %721 = vrot.lane.b32.xlu0 %v673, 16
        %v722 = vpop.permute.xlu0 %721
        %723 = vrot.lane.b32.xlu0 %v676, 16
        %v724 = vpop.permute.xlu0 %723
        %725 = vrot.lane.b32.xlu0 %v679, 16
        %v726 = vpop.permute.xlu0 %725
        %727 = vrot.lane.b32.xlu0 %v682, 16
        %v728 = vpop.permute.xlu0 %727
        %729 = vrot.lane.b32.xlu0 %v685, 16
        %v730 = vpop.permute.xlu0 %729
        %731 = vrot.lane.b32.xlu0 %v688, 16
        %v732 = vpop.permute.xlu0 %731
        %733 = vrot.lane.b32.xlu0 %v691, 16
        %v734 = vpop.permute.xlu0 %733
        %735 = vrot.lane.b32.xlu0 %v694, 16
        %v736 = vpop.permute.xlu0 %735
        %737 = vrot.lane.b32.xlu0 %v697, 16
        %v738 = vpop.permute.xlu0 %737
        %739 = vrot.lane.b32.xlu0 %v700, 16
        %v740 = vpop.permute.xlu0 %739
        %741 = vrot.lane.b32.xlu0 %v703, 16
        %v742 = vpop.permute.xlu0 %741
        %743 = vrot.lane.b32.xlu0 %v706, 16
        %v744 = vpop.permute.xlu0 %743
        %745 = vrot.lane.b32.xlu0 %v709, 16
        %v746 = vpop.permute.xlu0 %745
        %747 = vrot.lane.b32.xlu0 %v712, 16
        %v748 = vpop.permute.xlu0 %747
        %vm749 = vsmask.f32 6400
        %v750 = vrot.slane %v407, 1
        %v751 = vrot.slane %v409, 2
        %v752 = vor.u32 %v750, %v751
        %v753 = vshrl.u32 %v387, 16
        %v755 = vrot.slane %v753, 1
        %v756 = vrot.slane %v414, 2
        %v757 = vor.u32 %v755, %v756
        %v758 = vsel %vm749, %v752, %v757
        %v759 = vrot.slane %v419, 1
        %v760 = vrot.slane %v421, 2
        %v761 = vor.u32 %v759, %v760
        %v762 = vshrl.u32 %v388, 16
        %v764 = vrot.slane %v762, 1
        %v765 = vrot.slane %v426, 2
        %v766 = vor.u32 %v764, %v765
        %v767 = vsel %vm749, %v761, %v766
        %v768 = vrot.slane %v431, 1
        %v769 = vrot.slane %v433, 2
        %v770 = vor.u32 %v768, %v769
        %v771 = vshrl.u32 %v389, 16
        %v773 = vrot.slane %v771, 1
        %v774 = vrot.slane %v438, 2
        %v775 = vor.u32 %v773, %v774
        %v776 = vsel %vm749, %v770, %v775
        %v777 = vrot.slane %v443, 1
        %v778 = vrot.slane %v445, 2
        %v779 = vor.u32 %v777, %v778
        %v780 = vshrl.u32 %v390, 16
        %v782 = vrot.slane %v780, 1
        %v783 = vrot.slane %v450, 2
        %v784 = vor.u32 %v782, %v783
        %v785 = vsel %vm749, %v779, %v784
        %v786 = vrot.slane %v455, 1
        %v787 = vrot.slane %v457, 2
        %v788 = vor.u32 %v786, %v787
        %v789 = vshrl.u32 %v391, 16
        %v791 = vrot.slane %v789, 1
        %v792 = vrot.slane %v462, 2
        %v793 = vor.u32 %v791, %v792
        %v794 = vsel %vm749, %v788, %v793
        %v795 = vrot.slane %v467, 1
        %v796 = vrot.slane %v469, 2
        %v797 = vor.u32 %v795, %v796
        %v798 = vshrl.u32 %v392, 16
        %v800 = vrot.slane %v798, 1
        %v801 = vrot.slane %v474, 2
        %v802 = vor.u32 %v800, %v801
        %v803 = vsel %vm749, %v797, %v802
        %v804 = vrot.slane %v479, 1
        %v805 = vrot.slane %v481, 2
        %v806 = vor.u32 %v804, %v805
        %v807 = vshrl.u32 %v393, 16
        %v809 = vrot.slane %v807, 1
        %v810 = vrot.slane %v486, 2
        %v811 = vor.u32 %v809, %v810
        %v812 = vsel %vm749, %v806, %v811
        %v813 = vrot.slane %v491, 1
        %v814 = vrot.slane %v493, 2
        %v815 = vor.u32 %v813, %v814
        %v816 = vshrl.u32 %v394, 16
        %v818 = vrot.slane %v816, 1
        %v819 = vrot.slane %v498, 2
        %v820 = vor.u32 %v818, %v819
        %v821 = vsel %vm749, %v815, %v820
        %v822 = vrot.slane %v503, 1
        %v823 = vrot.slane %v505, 2
        %v824 = vor.u32 %v822, %v823
        %v825 = vshrl.u32 %v395, 16
        %v827 = vrot.slane %v825, 1
        %v828 = vrot.slane %v510, 2
        %v829 = vor.u32 %v827, %v828
        %v830 = vsel %vm749, %v824, %v829
        %v831 = vrot.slane %v515, 1
        %v832 = vrot.slane %v517, 2
        %v833 = vor.u32 %v831, %v832
        %v834 = vshrl.u32 %v396, 16
        %v836 = vrot.slane %v834, 1
        %v837 = vrot.slane %v522, 2
        %v838 = vor.u32 %v836, %v837
        %v839 = vsel %vm749, %v833, %v838
        %v840 = vrot.slane %v527, 1
        %v841 = vrot.slane %v529, 2
        %v842 = vor.u32 %v840, %v841
        %v843 = vshrl.u32 %v397, 16
        %v845 = vrot.slane %v843, 1
        %v846 = vrot.slane %v534, 2
        %v847 = vor.u32 %v845, %v846
        %v848 = vsel %vm749, %v842, %v847
        %v849 = vrot.slane %v539, 1
        %v850 = vrot.slane %v541, 2
        %v851 = vor.u32 %v849, %v850
        %v852 = vshrl.u32 %v398, 16
        %v854 = vrot.slane %v852, 1
        %v855 = vrot.slane %v546, 2
        %v856 = vor.u32 %v854, %v855
        %v857 = vsel %vm749, %v851, %v856
        %v858 = vrot.slane %v551, 1
        %v859 = vrot.slane %v553, 2
        %v860 = vor.u32 %v858, %v859
        %v861 = vshrl.u32 %v399, 16
        %v863 = vrot.slane %v861, 1
        %v864 = vrot.slane %v558, 2
        %v865 = vor.u32 %v863, %v864
        %v866 = vsel %vm749, %v860, %v865
        %v867 = vrot.slane %v563, 1
        %v868 = vrot.slane %v565, 2
        %v869 = vor.u32 %v867, %v868
        %v870 = vshrl.u32 %v400, 16
        %v872 = vrot.slane %v870, 1
        %v873 = vrot.slane %v570, 2
        %v874 = vor.u32 %v872, %v873
        %v875 = vsel %vm749, %v869, %v874
        %v876 = vrot.slane %v575, 1
        %v877 = vrot.slane %v577, 2
        %v878 = vor.u32 %v876, %v877
        %v879 = vshrl.u32 %v401, 16
        %v881 = vrot.slane %v879, 1
        %v882 = vrot.slane %v582, 2
        %v883 = vor.u32 %v881, %v882
        %v884 = vsel %vm749, %v878, %v883
        %v885 = vrot.slane %v587, 1
        %v886 = vrot.slane %v589, 2
        %v887 = vor.u32 %v885, %v886
        %v888 = vshrl.u32 %v402, 16
        %v890 = vrot.slane %v888, 1
        %v891 = vrot.slane %v594, 2
        %v892 = vor.u32 %v890, %v891
        %v893 = vsel %vm749, %v887, %v892
        %v894 = vrot.slane %v599, 1
        %v895 = vrot.slane %v601, 2
        %v896 = vor.u32 %v894, %v895
        %v897 = vshrl.u32 %v403, 16
        %v899 = vrot.slane %v897, 1
        %v900 = vrot.slane %v606, 2
        %v901 = vor.u32 %v899, %v900
        %v902 = vsel %vm749, %v896, %v901
        %v903 = vrot.slane %v611, 1
        %v904 = vrot.slane %v613, 2
        %v905 = vor.u32 %v903, %v904
        %v906 = vshrl.u32 %v404, 16
        %v908 = vrot.slane %v906, 1
        %v909 = vrot.slane %v618, 2
        %v910 = vor.u32 %v908, %v909
        %v911 = vsel %vm749, %v905, %v910
        %912 = vrot.lane.b32.xlu0 %v758, 24
        %v913 = vpop.permute.xlu0 %912
        %914 = vrot.lane.b32.xlu0 %v767, 24
        %v915 = vpop.permute.xlu0 %914
        %916 = vrot.lane.b32.xlu0 %v776, 24
        %v917 = vpop.permute.xlu0 %916
        %918 = vrot.lane.b32.xlu0 %v785, 24
        %v919 = vpop.permute.xlu0 %918
        %920 = vrot.lane.b32.xlu0 %v794, 24
        %v921 = vpop.permute.xlu0 %920
        %922 = vrot.lane.b32.xlu0 %v803, 24
        %v923 = vpop.permute.xlu0 %922
        %924 = vrot.lane.b32.xlu0 %v812, 24
        %v925 = vpop.permute.xlu0 %924
        %926 = vrot.lane.b32.xlu0 %v821, 24
        %v927 = vpop.permute.xlu0 %926
        %928 = vrot.lane.b32.xlu0 %v830, 24
        %v929 = vpop.permute.xlu0 %928
        %930 = vrot.lane.b32.xlu0 %v839, 24
        %v931 = vpop.permute.xlu0 %930
        %932 = vrot.lane.b32.xlu0 %v848, 24
        %v933 = vpop.permute.xlu0 %932
        %934 = vrot.lane.b32.xlu0 %v857, 24
        %v935 = vpop.permute.xlu0 %934
        %936 = vrot.lane.b32.xlu0 %v866, 24
        %v937 = vpop.permute.xlu0 %936
        %938 = vrot.lane.b32.xlu0 %v875, 24
        %v939 = vpop.permute.xlu0 %938
        %940 = vrot.lane.b32.xlu0 %v884, 24
        %v941 = vpop.permute.xlu0 %940
        %942 = vrot.lane.b32.xlu0 %v893, 24
        %v943 = vpop.permute.xlu0 %942
        %944 = vrot.lane.b32.xlu0 %v902, 24
        %v945 = vpop.permute.xlu0 %944
        %946 = vrot.lane.b32.xlu0 %v911, 24
        %v947 = vpop.permute.xlu0 %946
        %vm948 = vcmask 1045504
        %v949 = vrot.slane %v333, 2
        %v950 = vrot.slane %v387, 2
        %v951 = vsel %vm948, %v949, %v950
        %v952 = vrot.slane %v334, 2
        %v953 = vrot.slane %v388, 2
        %v954 = vsel %vm948, %v952, %v953
        %v955 = vrot.slane %v335, 2
        %v956 = vrot.slane %v389, 2
        %v957 = vsel %vm948, %v955, %v956
        %v958 = vrot.slane %v336, 2
        %v959 = vrot.slane %v390, 2
        %v960 = vsel %vm948, %v958, %v959
        %v961 = vrot.slane %v337, 2
        %v962 = vrot.slane %v391, 2
        %v963 = vsel %vm948, %v961, %v962
        %v964 = vrot.slane %v338, 2
        %v965 = vrot.slane %v392, 2
        %v966 = vsel %vm948, %v964, %v965
        %v967 = vrot.slane %v339, 2
        %v968 = vrot.slane %v393, 2
        %v969 = vsel %vm948, %v967, %v968
        %v970 = vrot.slane %v340, 2
        %v971 = vrot.slane %v394, 2
        %v972 = vsel %vm948, %v970, %v971
        %v973 = vrot.slane %v341, 2
        %v974 = vrot.slane %v395, 2
        %v975 = vsel %vm948, %v973, %v974
        %v976 = vrot.slane %v342, 2
        %v977 = vrot.slane %v396, 2
        %v978 = vsel %vm948, %v976, %v977
        %v979 = vrot.slane %v343, 2
        %v980 = vrot.slane %v397, 2
        %v981 = vsel %vm948, %v979, %v980
        %v982 = vrot.slane %v344, 2
        %v983 = vrot.slane %v398, 2
        %v984 = vsel %vm948, %v982, %v983
        %v985 = vrot.slane %v345, 2
        %v986 = vrot.slane %v399, 2
        %v987 = vsel %vm948, %v985, %v986
        %v988 = vrot.slane %v346, 2
        %v989 = vrot.slane %v400, 2
        %v990 = vsel %vm948, %v988, %v989
        %v991 = vrot.slane %v347, 2
        %v992 = vrot.slane %v401, 2
        %v993 = vsel %vm948, %v991, %v992
        %v994 = vrot.slane %v348, 2
        %v995 = vrot.slane %v402, 2
        %v996 = vsel %vm948, %v994, %v995
        %v997 = vrot.slane %v349, 2
        %v998 = vrot.slane %v403, 2
        %v999 = vsel %vm948, %v997, %v998
        %v1000 = vrot.slane %v350, 2
        %v1001 = vrot.slane %v404, 2
        %v1002 = vsel %vm948, %v1000, %v1001
        %1003 = vrot.lane.b32.xlu0 %v951, 32
        %v1004 = vpop.permute.xlu0 %1003
        %1005 = vrot.lane.b32.xlu0 %v954, 32
        %v1006 = vpop.permute.xlu0 %1005
        %1007 = vrot.lane.b32.xlu0 %v957, 32
        %v1008 = vpop.permute.xlu0 %1007
        %1009 = vrot.lane.b32.xlu0 %v960, 32
        %v1010 = vpop.permute.xlu0 %1009
        %1011 = vrot.lane.b32.xlu0 %v963, 32
        %v1012 = vpop.permute.xlu0 %1011
        %1013 = vrot.lane.b32.xlu0 %v966, 32
        %v1014 = vpop.permute.xlu0 %1013
        %1015 = vrot.lane.b32.xlu0 %v969, 32
        %v1016 = vpop.permute.xlu0 %1015
        %1017 = vrot.lane.b32.xlu0 %v972, 32
        %v1018 = vpop.permute.xlu0 %1017
        %1019 = vrot.lane.b32.xlu0 %v975, 32
        %v1020 = vpop.permute.xlu0 %1019
        %1021 = vrot.lane.b32.xlu0 %v978, 32
        %v1022 = vpop.permute.xlu0 %1021
        %1023 = vrot.lane.b32.xlu0 %v981, 32
        %v1024 = vpop.permute.xlu0 %1023
        %1025 = vrot.lane.b32.xlu0 %v984, 32
        %v1026 = vpop.permute.xlu0 %1025
        %1027 = vrot.lane.b32.xlu0 %v987, 32
        %v1028 = vpop.permute.xlu0 %1027
        %1029 = vrot.lane.b32.xlu0 %v990, 32
        %v1030 = vpop.permute.xlu0 %1029
        %1031 = vrot.lane.b32.xlu0 %v993, 32
        %v1032 = vpop.permute.xlu0 %1031
        %1033 = vrot.lane.b32.xlu0 %v996, 32
        %v1034 = vpop.permute.xlu0 %1033
        %1035 = vrot.lane.b32.xlu0 %v999, 32
        %v1036 = vpop.permute.xlu0 %1035
        %1037 = vrot.lane.b32.xlu0 %v1002, 32
        %v1038 = vpop.permute.xlu0 %1037
        %vm1039 = vsmask.f32 5376
        %v1040 = vrot.slane %v407, 2
        %v1041 = vrot.slane %v409, 3
        %v1042 = vor.u32 %v1040, %v1041
        %v1043 = vrot.slane %v753, 2
        %v1044 = vrot.slane %v414, 3
        %v1045 = vor.u32 %v1043, %v1044
        %v1046 = vsel %vm1039, %v1042, %v1045
        %v1047 = vrot.slane %v419, 2
        %v1048 = vrot.slane %v421, 3
        %v1049 = vor.u32 %v1047, %v1048
        %v1050 = vrot.slane %v762, 2
        %v1051 = vrot.slane %v426, 3
        %v1052 = vor.u32 %v1050, %v1051
        %v1053 = vsel %vm1039, %v1049, %v1052
        %v1054 = vrot.slane %v431, 2
        %v1055 = vrot.slane %v433, 3
        %v1056 = vor.u32 %v1054, %v1055
        %v1057 = vrot.slane %v771, 2
        %v1058 = vrot.slane %v438, 3
        %v1059 = vor.u32 %v1057, %v1058
        %v1060 = vsel %vm1039, %v1056, %v1059
        %v1061 = vrot.slane %v443, 2
        %v1062 = vrot.slane %v445, 3
        %v1063 = vor.u32 %v1061, %v1062
        %v1064 = vrot.slane %v780, 2
        %v1065 = vrot.slane %v450, 3
        %v1066 = vor.u32 %v1064, %v1065
        %v1067 = vsel %vm1039, %v1063, %v1066
        %v1068 = vrot.slane %v455, 2
        %v1069 = vrot.slane %v457, 3
        %v1070 = vor.u32 %v1068, %v1069
        %v1071 = vrot.slane %v789, 2
        %v1072 = vrot.slane %v462, 3
        %v1073 = vor.u32 %v1071, %v1072
        %v1074 = vsel %vm1039, %v1070, %v1073
        %v1075 = vrot.slane %v467, 2
        %v1076 = vrot.slane %v469, 3
        %v1077 = vor.u32 %v1075, %v1076
        %v1078 = vrot.slane %v798, 2
        %v1079 = vrot.slane %v474, 3
        %v1080 = vor.u32 %v1078, %v1079
        %v1081 = vsel %vm1039, %v1077, %v1080
        %v1082 = vrot.slane %v479, 2
        %v1083 = vrot.slane %v481, 3
        %v1084 = vor.u32 %v1082, %v1083
        %v1085 = vrot.slane %v807, 2
        %v1086 = vrot.slane %v486, 3
        %v1087 = vor.u32 %v1085, %v1086
        %v1088 = vsel %vm1039, %v1084, %v1087
        %v1089 = vrot.slane %v491, 2
        %v1090 = vrot.slane %v493, 3
        %v1091 = vor.u32 %v1089, %v1090
        %v1092 = vrot.slane %v816, 2
        %v1093 = vrot.slane %v498, 3
        %v1094 = vor.u32 %v1092, %v1093
        %v1095 = vsel %vm1039, %v1091, %v1094
        %v1096 = vrot.slane %v503, 2
        %v1097 = vrot.slane %v505, 3
        %v1098 = vor.u32 %v1096, %v1097
        %v1099 = vrot.slane %v825, 2
        %v1100 = vrot.slane %v510, 3
        %v1101 = vor.u32 %v1099, %v1100
        %v1102 = vsel %vm1039, %v1098, %v1101
        %v1103 = vrot.slane %v515, 2
        %v1104 = vrot.slane %v517, 3
        %v1105 = vor.u32 %v1103, %v1104
        %v1106 = vrot.slane %v834, 2
        %v1107 = vrot.slane %v522, 3
        %v1108 = vor.u32 %v1106, %v1107
        %v1109 = vsel %vm1039, %v1105, %v1108
        %v1110 = vrot.slane %v527, 2
        %v1111 = vrot.slane %v529, 3
        %v1112 = vor.u32 %v1110, %v1111
        %v1113 = vrot.slane %v843, 2
        %v1114 = vrot.slane %v534, 3
        %v1115 = vor.u32 %v1113, %v1114
        %v1116 = vsel %vm1039, %v1112, %v1115
        %v1117 = vrot.slane %v539, 2
        %v1118 = vrot.slane %v541, 3
        %v1119 = vor.u32 %v1117, %v1118
        %v1120 = vrot.slane %v852, 2
        %v1121 = vrot.slane %v546, 3
        %v1122 = vor.u32 %v1120, %v1121
        %v1123 = vsel %vm1039, %v1119, %v1122
        %v1124 = vrot.slane %v551, 2
        %v1125 = vrot.slane %v553, 3
        %v1126 = vor.u32 %v1124, %v1125
        %v1127 = vrot.slane %v861, 2
        %v1128 = vrot.slane %v558, 3
        %v1129 = vor.u32 %v1127, %v1128
        %v1130 = vsel %vm1039, %v1126, %v1129
        %v1131 = vrot.slane %v563, 2
        %v1132 = vrot.slane %v565, 3
        %v1133 = vor.u32 %v1131, %v1132
        %v1134 = vrot.slane %v870, 2
        %v1135 = vrot.slane %v570, 3
        %v1136 = vor.u32 %v1134, %v1135
        %v1137 = vsel %vm1039, %v1133, %v1136
        %v1138 = vrot.slane %v575, 2
        %v1139 = vrot.slane %v577, 3
        %v1140 = vor.u32 %v1138, %v1139
        %v1141 = vrot.slane %v879, 2
        %v1142 = vrot.slane %v582, 3
        %v1143 = vor.u32 %v1141, %v1142
        %v1144 = vsel %vm1039, %v1140, %v1143
        %v1145 = vrot.slane %v587, 2
        %v1146 = vrot.slane %v589, 3
        %v1147 = vor.u32 %v1145, %v1146
        %v1148 = vrot.slane %v888, 2
        %v1149 = vrot.slane %v594, 3
        %v1150 = vor.u32 %v1148, %v1149
        %v1151 = vsel %vm1039, %v1147, %v1150
        %v1152 = vrot.slane %v599, 2
        %v1153 = vrot.slane %v601, 3
        %v1154 = vor.u32 %v1152, %v1153
        %v1155 = vrot.slane %v897, 2
        %v1156 = vrot.slane %v606, 3
        %v1157 = vor.u32 %v1155, %v1156
        %v1158 = vsel %vm1039, %v1154, %v1157
        %v1159 = vrot.slane %v611, 2
        %v1160 = vrot.slane %v613, 3
        %v1161 = vor.u32 %v1159, %v1160
        %v1162 = vrot.slane %v906, 2
        %v1163 = vrot.slane %v618, 3
        %v1164 = vor.u32 %v1162, %v1163
        %v1165 = vsel %vm1039, %v1161, %v1164
        %1166 = vrot.lane.b32.xlu0 %v1046, 40
        %v1167 = vpop.permute.xlu0 %1166
        %1168 = vrot.lane.b32.xlu0 %v1053, 40
        %v1169 = vpop.permute.xlu0 %1168
        %1170 = vrot.lane.b32.xlu0 %v1060, 40
        %v1171 = vpop.permute.xlu0 %1170
        %1172 = vrot.lane.b32.xlu0 %v1067, 40
        %v1173 = vpop.permute.xlu0 %1172
        %1174 = vrot.lane.b32.xlu0 %v1074, 40
        %v1175 = vpop.permute.xlu0 %1174
        %1176 = vrot.lane.b32.xlu0 %v1081, 40
        %v1177 = vpop.permute.xlu0 %1176
        %1178 = vrot.lane.b32.xlu0 %v1088, 40
        %v1179 = vpop.permute.xlu0 %1178
        %1180 = vrot.lane.b32.xlu0 %v1095, 40
        %v1181 = vpop.permute.xlu0 %1180
        %1182 = vrot.lane.b32.xlu0 %v1102, 40
        %v1183 = vpop.permute.xlu0 %1182
        %1184 = vrot.lane.b32.xlu0 %v1109, 40
        %v1185 = vpop.permute.xlu0 %1184
        %1186 = vrot.lane.b32.xlu0 %v1116, 40
        %v1187 = vpop.permute.xlu0 %1186
        %1188 = vrot.lane.b32.xlu0 %v1123, 40
        %v1189 = vpop.permute.xlu0 %1188
        %1190 = vrot.lane.b32.xlu0 %v1130, 40
        %v1191 = vpop.permute.xlu0 %1190
        %1192 = vrot.lane.b32.xlu0 %v1137, 40
        %v1193 = vpop.permute.xlu0 %1192
        %1194 = vrot.lane.b32.xlu0 %v1144, 40
        %v1195 = vpop.permute.xlu0 %1194
        %1196 = vrot.lane.b32.xlu0 %v1151, 40
        %v1197 = vpop.permute.xlu0 %1196
        %1198 = vrot.lane.b32.xlu0 %v1158, 40
        %v1199 = vpop.permute.xlu0 %1198
        %1200 = vrot.lane.b32.xlu0 %v1165, 40
        %v1201 = vpop.permute.xlu0 %1200
        %vm1202 = vcmask 1044480
        %v1203 = vrot.slane %v333, 3
        %v1204 = vrot.slane %v387, 3
        %v1205 = vsel %vm1202, %v1203, %v1204
        %v1206 = vrot.slane %v334, 3
        %v1207 = vrot.slane %v388, 3
        %v1208 = vsel %vm1202, %v1206, %v1207
        %v1209 = vrot.slane %v335, 3
        %v1210 = vrot.slane %v389, 3
        %v1211 = vsel %vm1202, %v1209, %v1210
        %v1212 = vrot.slane %v336, 3
        %v1213 = vrot.slane %v390, 3
        %v1214 = vsel %vm1202, %v1212, %v1213
        %v1215 = vrot.slane %v337, 3
        %v1216 = vrot.slane %v391, 3
        %v1217 = vsel %vm1202, %v1215, %v1216
        %v1218 = vrot.slane %v338, 3
        %v1219 = vrot.slane %v392, 3
        %v1220 = vsel %vm1202, %v1218, %v1219
        %v1221 = vrot.slane %v339, 3
        %v1222 = vrot.slane %v393, 3
        %v1223 = vsel %vm1202, %v1221, %v1222
        %v1224 = vrot.slane %v340, 3
        %v1225 = vrot.slane %v394, 3
        %v1226 = vsel %vm1202, %v1224, %v1225
        %v1227 = vrot.slane %v341, 3
        %v1228 = vrot.slane %v395, 3
        %v1229 = vsel %vm1202, %v1227, %v1228
        %v1230 = vrot.slane %v342, 3
        %v1231 = vrot.slane %v396, 3
        %v1232 = vsel %vm1202, %v1230, %v1231
        %v1233 = vrot.slane %v343, 3
        %v1234 = vrot.slane %v397, 3
        %v1235 = vsel %vm1202, %v1233, %v1234
        %v1236 = vrot.slane %v344, 3
        %v1237 = vrot.slane %v398, 3
        %v1238 = vsel %vm1202, %v1236, %v1237
        %v1239 = vrot.slane %v345, 3
        %v1240 = vrot.slane %v399, 3
        %v1241 = vsel %vm1202, %v1239, %v1240
        %v1242 = vrot.slane %v346, 3
        %v1243 = vrot.slane %v400, 3
        %v1244 = vsel %vm1202, %v1242, %v1243
        %v1245 = vrot.slane %v347, 3
        %v1246 = vrot.slane %v401, 3
        %v1247 = vsel %vm1202, %v1245, %v1246
        %v1248 = vrot.slane %v348, 3
        %v1249 = vrot.slane %v402, 3
        %v1250 = vsel %vm1202, %v1248, %v1249
        %v1251 = vrot.slane %v349, 3
        %v1252 = vrot.slane %v403, 3
        %v1253 = vsel %vm1202, %v1251, %v1252
        %v1254 = vrot.slane %v350, 3
        %v1255 = vrot.slane %v404, 3
        %v1256 = vsel %vm1202, %v1254, %v1255
        %1257 = vrot.lane.b32.xlu0 %v1205, 48
        %v1258 = vpop.permute.xlu0 %1257
        %1259 = vrot.lane.b32.xlu0 %v1208, 48
        %v1260 = vpop.permute.xlu0 %1259
        %1261 = vrot.lane.b32.xlu0 %v1211, 48
        %v1262 = vpop.permute.xlu0 %1261
        %1263 = vrot.lane.b32.xlu0 %v1214, 48
        %v1264 = vpop.permute.xlu0 %1263
        %1265 = vrot.lane.b32.xlu0 %v1217, 48
        %v1266 = vpop.permute.xlu0 %1265
        %1267 = vrot.lane.b32.xlu0 %v1220, 48
        %v1268 = vpop.permute.xlu0 %1267
        %1269 = vrot.lane.b32.xlu0 %v1223, 48
        %v1270 = vpop.permute.xlu0 %1269
        %1271 = vrot.lane.b32.xlu0 %v1226, 48
        %v1272 = vpop.permute.xlu0 %1271
        %1273 = vrot.lane.b32.xlu0 %v1229, 48
        %v1274 = vpop.permute.xlu0 %1273
        %1275 = vrot.lane.b32.xlu0 %v1232, 48
        %v1276 = vpop.permute.xlu0 %1275
        %1277 = vrot.lane.b32.xlu0 %v1235, 48
        %v1278 = vpop.permute.xlu0 %1277
        %1279 = vrot.lane.b32.xlu0 %v1238, 48
        %v1280 = vpop.permute.xlu0 %1279
        %1281 = vrot.lane.b32.xlu0 %v1241, 48
        %v1282 = vpop.permute.xlu0 %1281
        %1283 = vrot.lane.b32.xlu0 %v1244, 48
        %v1284 = vpop.permute.xlu0 %1283
        %1285 = vrot.lane.b32.xlu0 %v1247, 48
        %v1286 = vpop.permute.xlu0 %1285
        %1287 = vrot.lane.b32.xlu0 %v1250, 48
        %v1288 = vpop.permute.xlu0 %1287
        %1289 = vrot.lane.b32.xlu0 %v1253, 48
        %v1290 = vpop.permute.xlu0 %1289
        %1291 = vrot.lane.b32.xlu0 %v1256, 48
        %v1292 = vpop.permute.xlu0 %1291
        %vm1293 = vsmask.f32 4352
        %v1294 = vrot.slane %v407, 3
        %v1295 = vrot.slane %v409, 4
        %v1296 = vor.u32 %v1294, %v1295
        %v1297 = vrot.slane %v753, 3
        %v1298 = vrot.slane %v414, 4
        %v1299 = vor.u32 %v1297, %v1298
        %v1300 = vsel %vm1293, %v1296, %v1299
        %v1301 = vrot.slane %v419, 3
        %v1302 = vrot.slane %v421, 4
        %v1303 = vor.u32 %v1301, %v1302
        %v1304 = vrot.slane %v762, 3
        %v1305 = vrot.slane %v426, 4
        %v1306 = vor.u32 %v1304, %v1305
        %v1307 = vsel %vm1293, %v1303, %v1306
        %v1308 = vrot.slane %v431, 3
        %v1309 = vrot.slane %v433, 4
        %v1310 = vor.u32 %v1308, %v1309
        %v1311 = vrot.slane %v771, 3
        %v1312 = vrot.slane %v438, 4
        %v1313 = vor.u32 %v1311, %v1312
        %v1314 = vsel %vm1293, %v1310, %v1313
        %v1315 = vrot.slane %v443, 3
        %v1316 = vrot.slane %v445, 4
        %v1317 = vor.u32 %v1315, %v1316
        %v1318 = vrot.slane %v780, 3
        %v1319 = vrot.slane %v450, 4
        %v1320 = vor.u32 %v1318, %v1319
        %v1321 = vsel %vm1293, %v1317, %v1320
        %v1322 = vrot.slane %v455, 3
        %v1323 = vrot.slane %v457, 4
        %v1324 = vor.u32 %v1322, %v1323
        %v1325 = vrot.slane %v789, 3
        %v1326 = vrot.slane %v462, 4
        %v1327 = vor.u32 %v1325, %v1326
        %v1328 = vsel %vm1293, %v1324, %v1327
        %v1329 = vrot.slane %v467, 3
        %v1330 = vrot.slane %v469, 4
        %v1331 = vor.u32 %v1329, %v1330
        %v1332 = vrot.slane %v798, 3
        %v1333 = vrot.slane %v474, 4
        %v1334 = vor.u32 %v1332, %v1333
        %v1335 = vsel %vm1293, %v1331, %v1334
        %v1336 = vrot.slane %v479, 3
        %v1337 = vrot.slane %v481, 4
        %v1338 = vor.u32 %v1336, %v1337
        %v1339 = vrot.slane %v807, 3
        %v1340 = vrot.slane %v486, 4
        %v1341 = vor.u32 %v1339, %v1340
        %v1342 = vsel %vm1293, %v1338, %v1341
        %v1343 = vrot.slane %v491, 3
        %v1344 = vrot.slane %v493, 4
        %v1345 = vor.u32 %v1343, %v1344
        %v1346 = vrot.slane %v816, 3
        %v1347 = vrot.slane %v498, 4
        %v1348 = vor.u32 %v1346, %v1347
        %v1349 = vsel %vm1293, %v1345, %v1348
        %v1350 = vrot.slane %v503, 3
        %v1351 = vrot.slane %v505, 4
        %v1352 = vor.u32 %v1350, %v1351
        %v1353 = vrot.slane %v825, 3
        %v1354 = vrot.slane %v510, 4
        %v1355 = vor.u32 %v1353, %v1354
        %v1356 = vsel %vm1293, %v1352, %v1355
        %v1357 = vrot.slane %v515, 3
        %v1358 = vrot.slane %v517, 4
        %v1359 = vor.u32 %v1357, %v1358
        %v1360 = vrot.slane %v834, 3
        %v1361 = vrot.slane %v522, 4
        %v1362 = vor.u32 %v1360, %v1361
        %v1363 = vsel %vm1293, %v1359, %v1362
        %v1364 = vrot.slane %v527, 3
        %v1365 = vrot.slane %v529, 4
        %v1366 = vor.u32 %v1364, %v1365
        %v1367 = vrot.slane %v843, 3
        %v1368 = vrot.slane %v534, 4
        %v1369 = vor.u32 %v1367, %v1368
        %v1370 = vsel %vm1293, %v1366, %v1369
        %v1371 = vrot.slane %v539, 3
        %v1372 = vrot.slane %v541, 4
        %v1373 = vor.u32 %v1371, %v1372
        %v1374 = vrot.slane %v852, 3
        %v1375 = vrot.slane %v546, 4
        %v1376 = vor.u32 %v1374, %v1375
        %v1377 = vsel %vm1293, %v1373, %v1376
        %v1378 = vrot.slane %v551, 3
        %v1379 = vrot.slane %v553, 4
        %v1380 = vor.u32 %v1378, %v1379
        %v1381 = vrot.slane %v861, 3
        %v1382 = vrot.slane %v558, 4
        %v1383 = vor.u32 %v1381, %v1382
        %v1384 = vsel %vm1293, %v1380, %v1383
        %v1385 = vrot.slane %v563, 3
        %v1386 = vrot.slane %v565, 4
        %v1387 = vor.u32 %v1385, %v1386
        %v1388 = vrot.slane %v870, 3
        %v1389 = vrot.slane %v570, 4
        %v1390 = vor.u32 %v1388, %v1389
        %v1391 = vsel %vm1293, %v1387, %v1390
        %v1392 = vrot.slane %v575, 3
        %v1393 = vrot.slane %v577, 4
        %v1394 = vor.u32 %v1392, %v1393
        %v1395 = vrot.slane %v879, 3
        %v1396 = vrot.slane %v582, 4
        %v1397 = vor.u32 %v1395, %v1396
        %v1398 = vsel %vm1293, %v1394, %v1397
        %v1399 = vrot.slane %v587, 3
        %v1400 = vrot.slane %v589, 4
        %v1401 = vor.u32 %v1399, %v1400
        %v1402 = vrot.slane %v888, 3
        %v1403 = vrot.slane %v594, 4
        %v1404 = vor.u32 %v1402, %v1403
        %v1405 = vsel %vm1293, %v1401, %v1404
        %v1406 = vrot.slane %v599, 3
        %v1407 = vrot.slane %v601, 4
        %v1408 = vor.u32 %v1406, %v1407
        %v1409 = vrot.slane %v897, 3
        %v1410 = vrot.slane %v606, 4
        %v1411 = vor.u32 %v1409, %v1410
        %v1412 = vsel %vm1293, %v1408, %v1411
        %v1413 = vrot.slane %v611, 3
        %v1414 = vrot.slane %v613, 4
        %v1415 = vor.u32 %v1413, %v1414
        %v1416 = vrot.slane %v906, 3
        %v1417 = vrot.slane %v618, 4
        %v1418 = vor.u32 %v1416, %v1417
        %v1419 = vsel %vm1293, %v1415, %v1418
        %1420 = vrot.lane.b32.xlu0 %v1300, 56
        %v1421 = vpop.permute.xlu0 %1420
        %1422 = vrot.lane.b32.xlu0 %v1307, 56
        %v1423 = vpop.permute.xlu0 %1422
        %1424 = vrot.lane.b32.xlu0 %v1314, 56
        %v1425 = vpop.permute.xlu0 %1424
        %1426 = vrot.lane.b32.xlu0 %v1321, 56
        %v1427 = vpop.permute.xlu0 %1426
        %1428 = vrot.lane.b32.xlu0 %v1328, 56
        %v1429 = vpop.permute.xlu0 %1428
        %1430 = vrot.lane.b32.xlu0 %v1335, 56
        %v1431 = vpop.permute.xlu0 %1430
        %1432 = vrot.lane.b32.xlu0 %v1342, 56
        %v1433 = vpop.permute.xlu0 %1432
        %1434 = vrot.lane.b32.xlu0 %v1349, 56
        %v1435 = vpop.permute.xlu0 %1434
        %1436 = vrot.lane.b32.xlu0 %v1356, 56
        %v1437 = vpop.permute.xlu0 %1436
        %1438 = vrot.lane.b32.xlu0 %v1363, 56
        %v1439 = vpop.permute.xlu0 %1438
        %1440 = vrot.lane.b32.xlu0 %v1370, 56
        %v1441 = vpop.permute.xlu0 %1440
        %1442 = vrot.lane.b32.xlu0 %v1377, 56
        %v1443 = vpop.permute.xlu0 %1442
        %1444 = vrot.lane.b32.xlu0 %v1384, 56
        %v1445 = vpop.permute.xlu0 %1444
        %1446 = vrot.lane.b32.xlu0 %v1391, 56
        %v1447 = vpop.permute.xlu0 %1446
        %1448 = vrot.lane.b32.xlu0 %v1398, 56
        %v1449 = vpop.permute.xlu0 %1448
        %1450 = vrot.lane.b32.xlu0 %v1405, 56
        %v1451 = vpop.permute.xlu0 %1450
        %1452 = vrot.lane.b32.xlu0 %v1412, 56
        %v1453 = vpop.permute.xlu0 %1452
        %1454 = vrot.lane.b32.xlu0 %v1419, 56
        %v1455 = vpop.permute.xlu0 %1454
        %v1456 = vpack.c.b16 %v369, %v298
        %v1457 = vpack.c.b16 %v370, %v300
        %v1458 = vpack.c.b16 %v371, %v302
        %v1459 = vpack.c.b16 %v372, %v304
        %v1460 = vpack.c.b16 %v373, %v306
        %v1461 = vpack.c.b16 %v374, %v308
        %v1462 = vpack.c.b16 %v375, %v310
        %v1463 = vpack.c.b16 %v376, %v312
        %v1464 = vpack.c.b16 %v377, %v314
        %v1465 = vpack.c.b16 %v378, %v316
        %v1466 = vpack.c.b16 %v379, %v318
        %v1467 = vpack.c.b16 %v380, %v320
        %v1468 = vpack.c.b16 %v381, %v322
        %v1469 = vpack.c.b16 %v382, %v324
        %v1470 = vpack.c.b16 %v383, %v326
        %v1471 = vpack.c.b16 %v384, %v328
        %v1472 = vpack.c.b16 %v385, %v330
        %v1473 = vpack.c.b16 %v386, %v332
        %1474 = vrot.lane.b32.xlu0 %v1456, 64
        %v1475 = vpop.permute.xlu0 %1474
        %1476 = vrot.lane.b32.xlu0 %v1457, 64
        %v1477 = vpop.permute.xlu0 %1476
        %1478 = vrot.lane.b32.xlu0 %v1458, 64
        %v1479 = vpop.permute.xlu0 %1478
        %1480 = vrot.lane.b32.xlu0 %v1459, 64
        %v1481 = vpop.permute.xlu0 %1480
        %1482 = vrot.lane.b32.xlu0 %v1460, 64
        %v1483 = vpop.permute.xlu0 %1482
        %1484 = vrot.lane.b32.xlu0 %v1461, 64
        %v1485 = vpop.permute.xlu0 %1484
        %1486 = vrot.lane.b32.xlu0 %v1462, 64
        %v1487 = vpop.permute.xlu0 %1486
        %1488 = vrot.lane.b32.xlu0 %v1463, 64
        %v1489 = vpop.permute.xlu0 %1488
        %1490 = vrot.lane.b32.xlu0 %v1464, 64
        %v1491 = vpop.permute.xlu0 %1490
        %1492 = vrot.lane.b32.xlu0 %v1465, 64
        %v1493 = vpop.permute.xlu0 %1492
        %1494 = vrot.lane.b32.xlu0 %v1466, 64
        %v1495 = vpop.permute.xlu0 %1494
        %1496 = vrot.lane.b32.xlu0 %v1467, 64
        %v1497 = vpop.permute.xlu0 %1496
        %1498 = vrot.lane.b32.xlu0 %v1468, 64
        %v1499 = vpop.permute.xlu0 %1498
        %1500 = vrot.lane.b32.xlu0 %v1469, 64
        %v1501 = vpop.permute.xlu0 %1500
        %1502 = vrot.lane.b32.xlu0 %v1470, 64
        %v1503 = vpop.permute.xlu0 %1502
        %1504 = vrot.lane.b32.xlu0 %v1471, 64
        %v1505 = vpop.permute.xlu0 %1504
        %1506 = vrot.lane.b32.xlu0 %v1472, 64
        %v1507 = vpop.permute.xlu0 %1506
        %1508 = vrot.lane.b32.xlu0 %v1473, 64
        %v1509 = vpop.permute.xlu0 %1508
        %v1528 = vunpack.c.l.b16 %v192
        %v1529 = vunpack.c.l.b16 %v196
        %v1530 = vunpack.c.l.b16 %v200
        %v1531 = vunpack.c.l.b16 %v204
        %v1532 = vunpack.c.l.b16 %v208
        %v1533 = vunpack.c.l.b16 %v212
        %v1534 = vunpack.c.l.b16 %v216
        %v1535 = vunpack.c.l.b16 %v220
        %v1536 = vunpack.c.l.b16 %v224
        %v1537 = vunpack.c.l.b16 %v228
        %v1538 = vunpack.c.l.b16 %v232
        %v1539 = vunpack.c.l.b16 %v236
        %v1540 = vunpack.c.l.b16 %v240
        %v1541 = vunpack.c.l.b16 %v244
        %v1542 = vunpack.c.l.b16 %v248
        %v1543 = vunpack.c.l.b16 %v252
        %v1544 = vunpack.c.l.b16 %v256
        %v1545 = vunpack.c.l.b16 %v260
        %v1546 = vpack.c.b16 %v1528, %v1528
        %v1547 = vpack.c.b16 %v1529, %v1529
        %v1548 = vpack.c.b16 %v1530, %v1530
        %v1549 = vpack.c.b16 %v1531, %v1531
        %v1550 = vpack.c.b16 %v1532, %v1532
        %v1551 = vpack.c.b16 %v1533, %v1533
        %v1552 = vpack.c.b16 %v1534, %v1534
        %v1553 = vpack.c.b16 %v1535, %v1535
        %v1554 = vpack.c.b16 %v1536, %v1536
        %v1555 = vpack.c.b16 %v1537, %v1537
        %v1556 = vpack.c.b16 %v1538, %v1538
        %v1557 = vpack.c.b16 %v1539, %v1539
        %v1558 = vpack.c.b16 %v1540, %v1540
        %v1559 = vpack.c.b16 %v1541, %v1541
        %v1560 = vpack.c.b16 %v1542, %v1542
        %v1561 = vpack.c.b16 %v1543, %v1543
        %v1562 = vpack.c.b16 %v1544, %v1544
        %v1563 = vpack.c.b16 %v1545, %v1545
        %v1565 = vshrl.u32 %v1456, 16
        %v1567 = vshll.u32 %v1456, 16
        %v1569 = vrot.slane %v1567, 1
        %v1570 = vor.u32 %v1565, %v1569
        %v1572 = vshll.u32 %v1546, 16
        %v1574 = vrot.slane %v1572, 1
        %v1575 = vsel %vm405, %v1570, %v1574
        %v1577 = vshrl.u32 %v1457, 16
        %v1579 = vshll.u32 %v1457, 16
        %v1581 = vrot.slane %v1579, 1
        %v1582 = vor.u32 %v1577, %v1581
        %v1584 = vshll.u32 %v1547, 16
        %v1586 = vrot.slane %v1584, 1
        %v1587 = vsel %vm405, %v1582, %v1586
        %v1589 = vshrl.u32 %v1458, 16
        %v1591 = vshll.u32 %v1458, 16
        %v1593 = vrot.slane %v1591, 1
        %v1594 = vor.u32 %v1589, %v1593
        %v1596 = vshll.u32 %v1548, 16
        %v1598 = vrot.slane %v1596, 1
        %v1599 = vsel %vm405, %v1594, %v1598
        %v1601 = vshrl.u32 %v1459, 16
        %v1603 = vshll.u32 %v1459, 16
        %v1605 = vrot.slane %v1603, 1
        %v1606 = vor.u32 %v1601, %v1605
        %v1608 = vshll.u32 %v1549, 16
        %v1610 = vrot.slane %v1608, 1
        %v1611 = vsel %vm405, %v1606, %v1610
        %v1613 = vshrl.u32 %v1460, 16
        %v1615 = vshll.u32 %v1460, 16
        %v1617 = vrot.slane %v1615, 1
        %v1618 = vor.u32 %v1613, %v1617
        %v1620 = vshll.u32 %v1550, 16
        %v1622 = vrot.slane %v1620, 1
        %v1623 = vsel %vm405, %v1618, %v1622
        %v1625 = vshrl.u32 %v1461, 16
        %v1627 = vshll.u32 %v1461, 16
        %v1629 = vrot.slane %v1627, 1
        %v1630 = vor.u32 %v1625, %v1629
        %v1632 = vshll.u32 %v1551, 16
        %v1634 = vrot.slane %v1632, 1
        %v1635 = vsel %vm405, %v1630, %v1634
        %v1637 = vshrl.u32 %v1462, 16
        %v1639 = vshll.u32 %v1462, 16
        %v1641 = vrot.slane %v1639, 1
        %v1642 = vor.u32 %v1637, %v1641
        %v1644 = vshll.u32 %v1552, 16
        %v1646 = vrot.slane %v1644, 1
        %v1647 = vsel %vm405, %v1642, %v1646
        %v1649 = vshrl.u32 %v1463, 16
        %v1651 = vshll.u32 %v1463, 16
        %v1653 = vrot.slane %v1651, 1
        %v1654 = vor.u32 %v1649, %v1653
        %v1656 = vshll.u32 %v1553, 16
        %v1658 = vrot.slane %v1656, 1
        %v1659 = vsel %vm405, %v1654, %v1658
        %v1661 = vshrl.u32 %v1464, 16
        %v1663 = vshll.u32 %v1464, 16
        %v1665 = vrot.slane %v1663, 1
        %v1666 = vor.u32 %v1661, %v1665
        %v1668 = vshll.u32 %v1554, 16
        %v1670 = vrot.slane %v1668, 1
        %v1671 = vsel %vm405, %v1666, %v1670
        %v1673 = vshrl.u32 %v1465, 16
        %v1675 = vshll.u32 %v1465, 16
        %v1677 = vrot.slane %v1675, 1
        %v1678 = vor.u32 %v1673, %v1677
        %v1680 = vshll.u32 %v1555, 16
        %v1682 = vrot.slane %v1680, 1
        %v1683 = vsel %vm405, %v1678, %v1682
        %v1685 = vshrl.u32 %v1466, 16
        %v1687 = vshll.u32 %v1466, 16
        %v1689 = vrot.slane %v1687, 1
        %v1690 = vor.u32 %v1685, %v1689
        %v1692 = vshll.u32 %v1556, 16
        %v1694 = vrot.slane %v1692, 1
        %v1695 = vsel %vm405, %v1690, %v1694
        %v1697 = vshrl.u32 %v1467, 16
        %v1699 = vshll.u32 %v1467, 16
        %v1701 = vrot.slane %v1699, 1
        %v1702 = vor.u32 %v1697, %v1701
        %v1704 = vshll.u32 %v1557, 16
        %v1706 = vrot.slane %v1704, 1
        %v1707 = vsel %vm405, %v1702, %v1706
        %v1709 = vshrl.u32 %v1468, 16
        %v1711 = vshll.u32 %v1468, 16
        %v1713 = vrot.slane %v1711, 1
        %v1714 = vor.u32 %v1709, %v1713
        %v1716 = vshll.u32 %v1558, 16
        %v1718 = vrot.slane %v1716, 1
        %v1719 = vsel %vm405, %v1714, %v1718
        %v1721 = vshrl.u32 %v1469, 16
        %v1723 = vshll.u32 %v1469, 16
        %v1725 = vrot.slane %v1723, 1
        %v1726 = vor.u32 %v1721, %v1725
        %v1728 = vshll.u32 %v1559, 16
        %v1730 = vrot.slane %v1728, 1
        %v1731 = vsel %vm405, %v1726, %v1730
        %v1733 = vshrl.u32 %v1470, 16
        %v1735 = vshll.u32 %v1470, 16
        %v1737 = vrot.slane %v1735, 1
        %v1738 = vor.u32 %v1733, %v1737
        %v1740 = vshll.u32 %v1560, 16
        %v1742 = vrot.slane %v1740, 1
        %v1743 = vsel %vm405, %v1738, %v1742
        %v1745 = vshrl.u32 %v1471, 16
        %v1747 = vshll.u32 %v1471, 16
        %v1749 = vrot.slane %v1747, 1
        %v1750 = vor.u32 %v1745, %v1749
        %v1752 = vshll.u32 %v1561, 16
        %v1754 = vrot.slane %v1752, 1
        %v1755 = vsel %vm405, %v1750, %v1754
        %v1757 = vshrl.u32 %v1472, 16
        %v1759 = vshll.u32 %v1472, 16
        %v1761 = vrot.slane %v1759, 1
        %v1762 = vor.u32 %v1757, %v1761
        %v1764 = vshll.u32 %v1562, 16
        %v1766 = vrot.slane %v1764, 1
        %v1767 = vsel %vm405, %v1762, %v1766
        %v1769 = vshrl.u32 %v1473, 16
        %v1771 = vshll.u32 %v1473, 16
        %v1773 = vrot.slane %v1771, 1
        %v1774 = vor.u32 %v1769, %v1773
        %v1776 = vshll.u32 %v1563, 16
        %v1778 = vrot.slane %v1776, 1
        %v1779 = vsel %vm405, %v1774, %v1778
        %1780 = vrot.lane.b32.xlu0 %v1575, 72
        %v1781 = vpop.permute.xlu0 %1780
        %1782 = vrot.lane.b32.xlu0 %v1587, 72
        %v1783 = vpop.permute.xlu0 %1782
        %1784 = vrot.lane.b32.xlu0 %v1599, 72
        %v1785 = vpop.permute.xlu0 %1784
        %1786 = vrot.lane.b32.xlu0 %v1611, 72
        %v1787 = vpop.permute.xlu0 %1786
        %1788 = vrot.lane.b32.xlu0 %v1623, 72
        %v1789 = vpop.permute.xlu0 %1788
        %1790 = vrot.lane.b32.xlu0 %v1635, 72
        %v1791 = vpop.permute.xlu0 %1790
        %1792 = vrot.lane.b32.xlu0 %v1647, 72
        %v1793 = vpop.permute.xlu0 %1792
        %1794 = vrot.lane.b32.xlu0 %v1659, 72
        %v1795 = vpop.permute.xlu0 %1794
        %1796 = vrot.lane.b32.xlu0 %v1671, 72
        %v1797 = vpop.permute.xlu0 %1796
        %1798 = vrot.lane.b32.xlu0 %v1683, 72
        %v1799 = vpop.permute.xlu0 %1798
        %1800 = vrot.lane.b32.xlu0 %v1695, 72
        %v1801 = vpop.permute.xlu0 %1800
        %1802 = vrot.lane.b32.xlu0 %v1707, 72
        %v1803 = vpop.permute.xlu0 %1802
        %1804 = vrot.lane.b32.xlu0 %v1719, 72
        %v1805 = vpop.permute.xlu0 %1804
        %1806 = vrot.lane.b32.xlu0 %v1731, 72
        %v1807 = vpop.permute.xlu0 %1806
        %1808 = vrot.lane.b32.xlu0 %v1743, 72
        %v1809 = vpop.permute.xlu0 %1808
        %1810 = vrot.lane.b32.xlu0 %v1755, 72
        %v1811 = vpop.permute.xlu0 %1810
        %1812 = vrot.lane.b32.xlu0 %v1767, 72
        %v1813 = vpop.permute.xlu0 %1812
        %1814 = vrot.lane.b32.xlu0 %v1779, 72
        %v1815 = vpop.permute.xlu0 %1814
        %v1816 = vrot.slane %v1456, 1
        %v1817 = vrot.slane %v1546, 1
        %v1818 = vsel %vm658, %v1816, %v1817
        %v1819 = vrot.slane %v1457, 1
        %v1820 = vrot.slane %v1547, 1
        %v1821 = vsel %vm658, %v1819, %v1820
        %v1822 = vrot.slane %v1458, 1
        %v1823 = vrot.slane %v1548, 1
        %v1824 = vsel %vm658, %v1822, %v1823
        %v1825 = vrot.slane %v1459, 1
        %v1826 = vrot.slane %v1549, 1
        %v1827 = vsel %vm658, %v1825, %v1826
        %v1828 = vrot.slane %v1460, 1
        %v1829 = vrot.slane %v1550, 1
        %v1830 = vsel %vm658, %v1828, %v1829
        %v1831 = vrot.slane %v1461, 1
        %v1832 = vrot.slane %v1551, 1
        %v1833 = vsel %vm658, %v1831, %v1832
        %v1834 = vrot.slane %v1462, 1
        %v1835 = vrot.slane %v1552, 1
        %v1836 = vsel %vm658, %v1834, %v1835
        %v1837 = vrot.slane %v1463, 1
        %v1838 = vrot.slane %v1553, 1
        %v1839 = vsel %vm658, %v1837, %v1838
        %v1840 = vrot.slane %v1464, 1
        %v1841 = vrot.slane %v1554, 1
        %v1842 = vsel %vm658, %v1840, %v1841
        %v1843 = vrot.slane %v1465, 1
        %v1844 = vrot.slane %v1555, 1
        %v1845 = vsel %vm658, %v1843, %v1844
        %v1846 = vrot.slane %v1466, 1
        %v1847 = vrot.slane %v1556, 1
        %v1848 = vsel %vm658, %v1846, %v1847
        %v1849 = vrot.slane %v1467, 1
        %v1850 = vrot.slane %v1557, 1
        %v1851 = vsel %vm658, %v1849, %v1850
        %v1852 = vrot.slane %v1468, 1
        %v1853 = vrot.slane %v1558, 1
        %v1854 = vsel %vm658, %v1852, %v1853
        %v1855 = vrot.slane %v1469, 1
        %v1856 = vrot.slane %v1559, 1
        %v1857 = vsel %vm658, %v1855, %v1856
        %v1858 = vrot.slane %v1470, 1
        %v1859 = vrot.slane %v1560, 1
        %v1860 = vsel %vm658, %v1858, %v1859
        %v1861 = vrot.slane %v1471, 1
        %v1862 = vrot.slane %v1561, 1
        %v1863 = vsel %vm658, %v1861, %v1862
        %v1864 = vrot.slane %v1472, 1
        %v1865 = vrot.slane %v1562, 1
        %v1866 = vsel %vm658, %v1864, %v1865
        %v1867 = vrot.slane %v1473, 1
        %v1868 = vrot.slane %v1563, 1
        %v1869 = vsel %vm658, %v1867, %v1868
        %1870 = vrot.lane.b32.xlu0 %v1818, 80
        %v1871 = vpop.permute.xlu0 %1870
        %1872 = vrot.lane.b32.xlu0 %v1821, 80
        %v1873 = vpop.permute.xlu0 %1872
        %1874 = vrot.lane.b32.xlu0 %v1824, 80
        %v1875 = vpop.permute.xlu0 %1874
        %1876 = vrot.lane.b32.xlu0 %v1827, 80
        %v1877 = vpop.permute.xlu0 %1876
        %1878 = vrot.lane.b32.xlu0 %v1830, 80
        %v1879 = vpop.permute.xlu0 %1878
        %1880 = vrot.lane.b32.xlu0 %v1833, 80
        %v1881 = vpop.permute.xlu0 %1880
        %1882 = vrot.lane.b32.xlu0 %v1836, 80
        %v1883 = vpop.permute.xlu0 %1882
        %1884 = vrot.lane.b32.xlu0 %v1839, 80
        %v1885 = vpop.permute.xlu0 %1884
        %1886 = vrot.lane.b32.xlu0 %v1842, 80
        %v1887 = vpop.permute.xlu0 %1886
        %1888 = vrot.lane.b32.xlu0 %v1845, 80
        %v1889 = vpop.permute.xlu0 %1888
        %1890 = vrot.lane.b32.xlu0 %v1848, 80
        %v1891 = vpop.permute.xlu0 %1890
        %1892 = vrot.lane.b32.xlu0 %v1851, 80
        %v1893 = vpop.permute.xlu0 %1892
        %1894 = vrot.lane.b32.xlu0 %v1854, 80
        %v1895 = vpop.permute.xlu0 %1894
        %1896 = vrot.lane.b32.xlu0 %v1857, 80
        %v1897 = vpop.permute.xlu0 %1896
        %1898 = vrot.lane.b32.xlu0 %v1860, 80
        %v1899 = vpop.permute.xlu0 %1898
        %1900 = vrot.lane.b32.xlu0 %v1863, 80
        %v1901 = vpop.permute.xlu0 %1900
        %1902 = vrot.lane.b32.xlu0 %v1866, 80
        %v1903 = vpop.permute.xlu0 %1902
        %1904 = vrot.lane.b32.xlu0 %v1869, 80
        %v1905 = vpop.permute.xlu0 %1904
        %vm1906 = vcmask 64512
        %v1908 = vsel %vm1906, %v333, %v623
        %v1910 = vsel %vm1906, %v334, %v625
        %v1912 = vsel %vm1906, %v335, %v627
        %v1914 = vsel %vm1906, %v336, %v629
        %v1916 = vsel %vm1906, %v337, %v631
        %v1918 = vsel %vm1906, %v338, %v633
        %v1920 = vsel %vm1906, %v339, %v635
        %v1922 = vsel %vm1906, %v340, %v637
        %v1924 = vsel %vm1906, %v341, %v639
        %v1926 = vsel %vm1906, %v342, %v641
        %v1928 = vsel %vm1906, %v343, %v643
        %v1930 = vsel %vm1906, %v344, %v645
        %v1932 = vsel %vm1906, %v345, %v647
        %v1934 = vsel %vm1906, %v346, %v649
        %v1936 = vsel %vm1906, %v347, %v651
        %v1938 = vsel %vm1906, %v348, %v653
        %v1940 = vsel %vm1906, %v349, %v655
        %v1942 = vsel %vm1906, %v350, %v657
        %vm1943 = vcmask 130048
        %v1945 = vsel %vm1943, %v1908, %v714
        %v1947 = vsel %vm1943, %v1910, %v716
        %v1949 = vsel %vm1943, %v1912, %v718
        %v1951 = vsel %vm1943, %v1914, %v720
        %v1953 = vsel %vm1943, %v1916, %v722
        %v1955 = vsel %vm1943, %v1918, %v724
        %v1957 = vsel %vm1943, %v1920, %v726
        %v1959 = vsel %vm1943, %v1922, %v728
        %v1961 = vsel %vm1943, %v1924, %v730
        %v1963 = vsel %vm1943, %v1926, %v732
        %v1965 = vsel %vm1943, %v1928, %v734
        %v1967 = vsel %vm1943, %v1930, %v736
        %v1969 = vsel %vm1943, %v1932, %v738
        %v1971 = vsel %vm1943, %v1934, %v740
        %v1973 = vsel %vm1943, %v1936, %v742
        %v1975 = vsel %vm1943, %v1938, %v744
        %v1977 = vsel %vm1943, %v1940, %v746
        %v1979 = vsel %vm1943, %v1942, %v748
        %vm1980 = vcmask 195584
        %v1982 = vsel %vm1980, %v1945, %v913
        %v1984 = vsel %vm1980, %v1947, %v915
        %v1986 = vsel %vm1980, %v1949, %v917
        %v1988 = vsel %vm1980, %v1951, %v919
        %v1990 = vsel %vm1980, %v1953, %v921
        %v1992 = vsel %vm1980, %v1955, %v923
        %v1994 = vsel %vm1980, %v1957, %v925
        %v1996 = vsel %vm1980, %v1959, %v927
        %v1998 = vsel %vm1980, %v1961, %v929
        %v2000 = vsel %vm1980, %v1963, %v931
        %v2002 = vsel %vm1980, %v1965, %v933
        %v2004 = vsel %vm1980, %v1967, %v935
        %v2006 = vsel %vm1980, %v1969, %v937
        %v2008 = vsel %vm1980, %v1971, %v939
        %v2010 = vsel %vm1980, %v1973, %v941
        %v2012 = vsel %vm1980, %v1975, %v943
        %v2014 = vsel %vm1980, %v1977, %v945
        %v2016 = vsel %vm1980, %v1979, %v947
        %vm2017 = vcmask 261120
        %v2019 = vsel %vm2017, %v1982, %v1004
        %v2021 = vsel %vm2017, %v1984, %v1006
        %v2023 = vsel %vm2017, %v1986, %v1008
        %v2025 = vsel %vm2017, %v1988, %v1010
        %v2027 = vsel %vm2017, %v1990, %v1012
        %v2029 = vsel %vm2017, %v1992, %v1014
        %v2031 = vsel %vm2017, %v1994, %v1016
        %v2033 = vsel %vm2017, %v1996, %v1018
        %v2035 = vsel %vm2017, %v1998, %v1020
        %v2037 = vsel %vm2017, %v2000, %v1022
        %v2039 = vsel %vm2017, %v2002, %v1024
        %v2041 = vsel %vm2017, %v2004, %v1026
        %v2043 = vsel %vm2017, %v2006, %v1028
        %v2045 = vsel %vm2017, %v2008, %v1030
        %v2047 = vsel %vm2017, %v2010, %v1032
        %v2049 = vsel %vm2017, %v2012, %v1034
        %v2051 = vsel %vm2017, %v2014, %v1036
        %v2053 = vsel %vm2017, %v2016, %v1038
        %vm2054 = vcmask 326656
        %v2056 = vsel %vm2054, %v2019, %v1167
        %v2058 = vsel %vm2054, %v2021, %v1169
        %v2060 = vsel %vm2054, %v2023, %v1171
        %v2062 = vsel %vm2054, %v2025, %v1173
        %v2064 = vsel %vm2054, %v2027, %v1175
        %v2066 = vsel %vm2054, %v2029, %v1177
        %v2068 = vsel %vm2054, %v2031, %v1179
        %v2070 = vsel %vm2054, %v2033, %v1181
        %v2072 = vsel %vm2054, %v2035, %v1183
        %v2074 = vsel %vm2054, %v2037, %v1185
        %v2076 = vsel %vm2054, %v2039, %v1187
        %v2078 = vsel %vm2054, %v2041, %v1189
        %v2080 = vsel %vm2054, %v2043, %v1191
        %v2082 = vsel %vm2054, %v2045, %v1193
        %v2084 = vsel %vm2054, %v2047, %v1195
        %v2086 = vsel %vm2054, %v2049, %v1197
        %v2088 = vsel %vm2054, %v2051, %v1199
        %v2090 = vsel %vm2054, %v2053, %v1201
        %vm2091 = vcmask 392192
        %v2093 = vsel %vm2091, %v2056, %v1258
        %v2095 = vsel %vm2091, %v2058, %v1260
        %v2097 = vsel %vm2091, %v2060, %v1262
        %v2099 = vsel %vm2091, %v2062, %v1264
        %v2101 = vsel %vm2091, %v2064, %v1266
        %v2103 = vsel %vm2091, %v2066, %v1268
        %v2105 = vsel %vm2091, %v2068, %v1270
        %v2107 = vsel %vm2091, %v2070, %v1272
        %v2109 = vsel %vm2091, %v2072, %v1274
        %v2111 = vsel %vm2091, %v2074, %v1276
        %v2113 = vsel %vm2091, %v2076, %v1278
        %v2115 = vsel %vm2091, %v2078, %v1280
        %v2117 = vsel %vm2091, %v2080, %v1282
        %v2119 = vsel %vm2091, %v2082, %v1284
        %v2121 = vsel %vm2091, %v2084, %v1286
        %v2123 = vsel %vm2091, %v2086, %v1288
        %v2125 = vsel %vm2091, %v2088, %v1290
        %v2127 = vsel %vm2091, %v2090, %v1292
        %vm2128 = vcmask 457728
        %v2130 = vsel %vm2128, %v2093, %v1421
        %v2132 = vsel %vm2128, %v2095, %v1423
        %v2134 = vsel %vm2128, %v2097, %v1425
        %v2136 = vsel %vm2128, %v2099, %v1427
        %v2138 = vsel %vm2128, %v2101, %v1429
        %v2140 = vsel %vm2128, %v2103, %v1431
        %v2142 = vsel %vm2128, %v2105, %v1433
        %v2144 = vsel %vm2128, %v2107, %v1435
        %v2146 = vsel %vm2128, %v2109, %v1437
        %v2148 = vsel %vm2128, %v2111, %v1439
        %v2150 = vsel %vm2128, %v2113, %v1441
        %v2152 = vsel %vm2128, %v2115, %v1443
        %v2154 = vsel %vm2128, %v2117, %v1445
        %v2156 = vsel %vm2128, %v2119, %v1447
        %v2158 = vsel %vm2128, %v2121, %v1449
        %v2160 = vsel %vm2128, %v2123, %v1451
        %v2162 = vsel %vm2128, %v2125, %v1453
        %v2164 = vsel %vm2128, %v2127, %v1455
        %vm2165 = vcmask 523264
        %v2167 = vsel %vm2165, %v2130, %v1475
        %v2169 = vsel %vm2165, %v2132, %v1477
        %v2171 = vsel %vm2165, %v2134, %v1479
        %v2173 = vsel %vm2165, %v2136, %v1481
        %v2175 = vsel %vm2165, %v2138, %v1483
        %v2177 = vsel %vm2165, %v2140, %v1485
        %v2179 = vsel %vm2165, %v2142, %v1487
        %v2181 = vsel %vm2165, %v2144, %v1489
        %v2183 = vsel %vm2165, %v2146, %v1491
        %v2185 = vsel %vm2165, %v2148, %v1493
        %v2187 = vsel %vm2165, %v2150, %v1495
        %v2189 = vsel %vm2165, %v2152, %v1497
        %v2191 = vsel %vm2165, %v2154, %v1499
        %v2193 = vsel %vm2165, %v2156, %v1501
        %v2195 = vsel %vm2165, %v2158, %v1503
        %v2197 = vsel %vm2165, %v2160, %v1505
        %v2199 = vsel %vm2165, %v2162, %v1507
        %v2201 = vsel %vm2165, %v2164, %v1509
        %vm2202 = vcmask 588800
        %v2204 = vsel %vm2202, %v2167, %v1781
        %v2206 = vsel %vm2202, %v2169, %v1783
        %v2208 = vsel %vm2202, %v2171, %v1785
        %v2210 = vsel %vm2202, %v2173, %v1787
        %v2212 = vsel %vm2202, %v2175, %v1789
        %v2214 = vsel %vm2202, %v2177, %v1791
        %v2216 = vsel %vm2202, %v2179, %v1793
        %v2218 = vsel %vm2202, %v2181, %v1795
        %v2220 = vsel %vm2202, %v2183, %v1797
        %v2222 = vsel %vm2202, %v2185, %v1799
        %v2224 = vsel %vm2202, %v2187, %v1801
        %v2226 = vsel %vm2202, %v2189, %v1803
        %v2228 = vsel %vm2202, %v2191, %v1805
        %v2230 = vsel %vm2202, %v2193, %v1807
        %v2232 = vsel %vm2202, %v2195, %v1809
        %v2234 = vsel %vm2202, %v2197, %v1811
        %v2236 = vsel %vm2202, %v2199, %v1813
        %v2238 = vsel %vm2202, %v2201, %v1815
        %vm2239 = vcmask 654336
        %v2241 = vsel %vm2239, %v2204, %v1871
        %v2243 = vsel %vm2239, %v2206, %v1873
        %v2245 = vsel %vm2239, %v2208, %v1875
        %v2247 = vsel %vm2239, %v2210, %v1877
        %v2249 = vsel %vm2239, %v2212, %v1879
        %v2251 = vsel %vm2239, %v2214, %v1881
        %v2253 = vsel %vm2239, %v2216, %v1883
        %v2255 = vsel %vm2239, %v2218, %v1885
        %v2257 = vsel %vm2239, %v2220, %v1887
        %v2259 = vsel %vm2239, %v2222, %v1889
        %v2261 = vsel %vm2239, %v2224, %v1891
        %v2263 = vsel %vm2239, %v2226, %v1893
        %v2265 = vsel %vm2239, %v2228, %v1895
        %v2267 = vsel %vm2239, %v2230, %v1897
        %v2269 = vsel %vm2239, %v2232, %v1899
        %v2271 = vsel %vm2239, %v2234, %v1901
        %v2273 = vsel %vm2239, %v2236, %v1903
        %v2275 = vsel %vm2239, %v2238, %v1905
        %2284 = vrot.lane.b32.xlu0 %v2243, 88
        %v2285 = vpop.permute.xlu0 %2284
        %2286 = vrot.lane.b32.xlu0 %v2245, 88
        %v2287 = vpop.permute.xlu0 %2286
        %2288 = vrot.lane.b32.xlu0 %v2247, 88
        %v2289 = vpop.permute.xlu0 %2288
        %2290 = vrot.lane.b32.xlu0 %v2249, 88
        %v2291 = vpop.permute.xlu0 %2290
        %2292 = vrot.lane.b32.xlu0 %v2251, 88
        %v2293 = vpop.permute.xlu0 %2292
        %2294 = vrot.lane.b32.xlu0 %v2253, 88
        %v2295 = vpop.permute.xlu0 %2294
        %2296 = vrot.lane.b32.xlu0 %v2255, 88
        %v2297 = vpop.permute.xlu0 %2296
        %2298 = vrot.lane.b32.xlu0 %v2257, 88
        %v2299 = vpop.permute.xlu0 %2298
        %2301 = vrot.lane.b32.xlu0 %v2245, 48
        %v2302 = vpop.permute.xlu0 %2301
        %2303 = vrot.lane.b32.xlu0 %v2247, 48
        %v2304 = vpop.permute.xlu0 %2303
        %2305 = vrot.lane.b32.xlu0 %v2249, 48
        %v2306 = vpop.permute.xlu0 %2305
        %2307 = vrot.lane.b32.xlu0 %v2251, 48
        %v2308 = vpop.permute.xlu0 %2307
        %2309 = vrot.lane.b32.xlu0 %v2253, 48
        %v2310 = vpop.permute.xlu0 %2309
        %2311 = vrot.lane.b32.xlu0 %v2255, 48
        %v2312 = vpop.permute.xlu0 %2311
        %2313 = vrot.lane.b32.xlu0 %v2257, 48
        %v2314 = vpop.permute.xlu0 %2313
        %2315 = vrot.lane.b32.xlu0 %v2259, 48
        %v2316 = vpop.permute.xlu0 %2315
        %2318 = vrot.lane.b32.xlu0 %v2247, 8
        %v2319 = vpop.permute.xlu0 %2318
        %2320 = vrot.lane.b32.xlu0 %v2249, 8
        %v2321 = vpop.permute.xlu0 %2320
        %2322 = vrot.lane.b32.xlu0 %v2251, 8
        %v2323 = vpop.permute.xlu0 %2322
        %2324 = vrot.lane.b32.xlu0 %v2253, 8
        %v2325 = vpop.permute.xlu0 %2324
        %2326 = vrot.lane.b32.xlu0 %v2255, 8
        %v2327 = vpop.permute.xlu0 %2326
        %2328 = vrot.lane.b32.xlu0 %v2257, 8
        %v2329 = vpop.permute.xlu0 %2328
        %2330 = vrot.lane.b32.xlu0 %v2259, 8
        %v2331 = vpop.permute.xlu0 %2330
        %2332 = vrot.lane.b32.xlu0 %v2261, 8
        %v2333 = vpop.permute.xlu0 %2332
        %2335 = vrot.lane.b32.xlu0 %v2249, 96
        %v2336 = vpop.permute.xlu0 %2335
        %2337 = vrot.lane.b32.xlu0 %v2251, 96
        %v2338 = vpop.permute.xlu0 %2337
        %2339 = vrot.lane.b32.xlu0 %v2253, 96
        %v2340 = vpop.permute.xlu0 %2339
        %2341 = vrot.lane.b32.xlu0 %v2255, 96
        %v2342 = vpop.permute.xlu0 %2341
        %2343 = vrot.lane.b32.xlu0 %v2257, 96
        %v2344 = vpop.permute.xlu0 %2343
        %2345 = vrot.lane.b32.xlu0 %v2259, 96
        %v2346 = vpop.permute.xlu0 %2345
        %2347 = vrot.lane.b32.xlu0 %v2261, 96
        %v2348 = vpop.permute.xlu0 %2347
        %2349 = vrot.lane.b32.xlu0 %v2263, 96
        %v2350 = vpop.permute.xlu0 %2349
        %2352 = vrot.lane.b32.xlu0 %v2251, 56
        %v2353 = vpop.permute.xlu0 %2352
        %2354 = vrot.lane.b32.xlu0 %v2253, 56
        %v2355 = vpop.permute.xlu0 %2354
        %2356 = vrot.lane.b32.xlu0 %v2255, 56
        %v2357 = vpop.permute.xlu0 %2356
        %2358 = vrot.lane.b32.xlu0 %v2257, 56
        %v2359 = vpop.permute.xlu0 %2358
        %2360 = vrot.lane.b32.xlu0 %v2259, 56
        %v2361 = vpop.permute.xlu0 %2360
        %2362 = vrot.lane.b32.xlu0 %v2261, 56
        %v2363 = vpop.permute.xlu0 %2362
        %2364 = vrot.lane.b32.xlu0 %v2263, 56
        %v2365 = vpop.permute.xlu0 %2364
        %2366 = vrot.lane.b32.xlu0 %v2265, 56
        %v2367 = vpop.permute.xlu0 %2366
        %2369 = vrot.lane.b32.xlu0 %v2253, 16
        %v2370 = vpop.permute.xlu0 %2369
        %2371 = vrot.lane.b32.xlu0 %v2255, 16
        %v2372 = vpop.permute.xlu0 %2371
        %2373 = vrot.lane.b32.xlu0 %v2257, 16
        %v2374 = vpop.permute.xlu0 %2373
        %2375 = vrot.lane.b32.xlu0 %v2259, 16
        %v2376 = vpop.permute.xlu0 %2375
        %2377 = vrot.lane.b32.xlu0 %v2261, 16
        %v2378 = vpop.permute.xlu0 %2377
        %2379 = vrot.lane.b32.xlu0 %v2263, 16
        %v2380 = vpop.permute.xlu0 %2379
        %2381 = vrot.lane.b32.xlu0 %v2265, 16
        %v2382 = vpop.permute.xlu0 %2381
        %2383 = vrot.lane.b32.xlu0 %v2267, 16
        %v2384 = vpop.permute.xlu0 %2383
        %2386 = vrot.lane.b32.xlu0 %v2255, 104
        %v2387 = vpop.permute.xlu0 %2386
        %2388 = vrot.lane.b32.xlu0 %v2257, 104
        %v2389 = vpop.permute.xlu0 %2388
        %2390 = vrot.lane.b32.xlu0 %v2259, 104
        %v2391 = vpop.permute.xlu0 %2390
        %2392 = vrot.lane.b32.xlu0 %v2261, 104
        %v2393 = vpop.permute.xlu0 %2392
        %2394 = vrot.lane.b32.xlu0 %v2263, 104
        %v2395 = vpop.permute.xlu0 %2394
        %2396 = vrot.lane.b32.xlu0 %v2265, 104
        %v2397 = vpop.permute.xlu0 %2396
        %2398 = vrot.lane.b32.xlu0 %v2267, 104
        %v2399 = vpop.permute.xlu0 %2398
        %2400 = vrot.lane.b32.xlu0 %v2269, 104
        %v2401 = vpop.permute.xlu0 %2400
        %2403 = vrot.lane.b32.xlu0 %v2257, 64
        %v2404 = vpop.permute.xlu0 %2403
        %2405 = vrot.lane.b32.xlu0 %v2259, 64
        %v2406 = vpop.permute.xlu0 %2405
        %2407 = vrot.lane.b32.xlu0 %v2261, 64
        %v2408 = vpop.permute.xlu0 %2407
        %2409 = vrot.lane.b32.xlu0 %v2263, 64
        %v2410 = vpop.permute.xlu0 %2409
        %2411 = vrot.lane.b32.xlu0 %v2265, 64
        %v2412 = vpop.permute.xlu0 %2411
        %2413 = vrot.lane.b32.xlu0 %v2267, 64
        %v2414 = vpop.permute.xlu0 %2413
        %2415 = vrot.lane.b32.xlu0 %v2269, 64
        %v2416 = vpop.permute.xlu0 %2415
        %2417 = vrot.lane.b32.xlu0 %v2271, 64
        %v2418 = vpop.permute.xlu0 %2417
        %2420 = vrot.lane.b32.xlu0 %v2259, 24
        %v2421 = vpop.permute.xlu0 %2420
        %2422 = vrot.lane.b32.xlu0 %v2261, 24
        %v2423 = vpop.permute.xlu0 %2422
        %2424 = vrot.lane.b32.xlu0 %v2263, 24
        %v2425 = vpop.permute.xlu0 %2424
        %2426 = vrot.lane.b32.xlu0 %v2265, 24
        %v2427 = vpop.permute.xlu0 %2426
        %2428 = vrot.lane.b32.xlu0 %v2267, 24
        %v2429 = vpop.permute.xlu0 %2428
        %2430 = vrot.lane.b32.xlu0 %v2269, 24
        %v2431 = vpop.permute.xlu0 %2430
        %2432 = vrot.lane.b32.xlu0 %v2271, 24
        %v2433 = vpop.permute.xlu0 %2432
        %2434 = vrot.lane.b32.xlu0 %v2273, 24
        %v2435 = vpop.permute.xlu0 %2434
        %2437 = vrot.lane.b32.xlu0 %v2261, 112
        %v2438 = vpop.permute.xlu0 %2437
        %2439 = vrot.lane.b32.xlu0 %v2263, 112
        %v2440 = vpop.permute.xlu0 %2439
        %2441 = vrot.lane.b32.xlu0 %v2265, 112
        %v2442 = vpop.permute.xlu0 %2441
        %2443 = vrot.lane.b32.xlu0 %v2267, 112
        %v2444 = vpop.permute.xlu0 %2443
        %2445 = vrot.lane.b32.xlu0 %v2269, 112
        %v2446 = vpop.permute.xlu0 %2445
        %2447 = vrot.lane.b32.xlu0 %v2271, 112
        %v2448 = vpop.permute.xlu0 %2447
        %2449 = vrot.lane.b32.xlu0 %v2273, 112
        %v2450 = vpop.permute.xlu0 %2449
        %2451 = vrot.lane.b32.xlu0 %v2275, 112
        %v2452 = vpop.permute.xlu0 %2451
        %vm2453 = vcmask 719872
        %v2455 = vsel %vm2453, %v2241, %v2285
        %v2458 = vsel %vm2453, %v2243, %v2287
        %v2461 = vsel %vm2453, %v2245, %v2289
        %v2464 = vsel %vm2453, %v2247, %v2291
        %v2467 = vsel %vm2453, %v2249, %v2293
        %v2470 = vsel %vm2453, %v2251, %v2295
        %v2473 = vsel %vm2453, %v2253, %v2297
        %v2476 = vsel %vm2453, %v2255, %v2299
        %v2479 = vsel %vm2091, %v2285, %v2302
        %v2482 = vsel %vm2091, %v2287, %v2304
        %v2485 = vsel %vm2091, %v2289, %v2306
        %v2488 = vsel %vm2091, %v2291, %v2308
        %v2491 = vsel %vm2091, %v2293, %v2310
        %v2494 = vsel %vm2091, %v2295, %v2312
        %v2497 = vsel %vm2091, %v2297, %v2314
        %v2500 = vsel %vm2091, %v2299, %v2316
        %v2503 = vsel %vm1906, %v2302, %v2319
        %v2505 = vsel %vm1906, %v2304, %v2321
        %v2507 = vsel %vm1906, %v2306, %v2323
        %v2509 = vsel %vm1906, %v2308, %v2325
        %v2511 = vsel %vm1906, %v2310, %v2327
        %v2513 = vsel %vm1906, %v2312, %v2329
        %v2515 = vsel %vm1906, %v2314, %v2331
        %v2517 = vsel %vm1906, %v2316, %v2333
        %vm2518 = vcmask 785408
        %v2520 = vsel %vm2518, %v2503, %v2336
        %v2523 = vsel %vm2518, %v2505, %v2338
        %v2526 = vsel %vm2518, %v2507, %v2340
        %v2529 = vsel %vm2518, %v2509, %v2342
        %v2532 = vsel %vm2518, %v2511, %v2344
        %v2535 = vsel %vm2518, %v2513, %v2346
        %v2538 = vsel %vm2518, %v2515, %v2348
        %v2541 = vsel %vm2518, %v2517, %v2350
        %v2544 = vsel %vm2128, %v2336, %v2353
        %v2547 = vsel %vm2128, %v2338, %v2355
        %v2550 = vsel %vm2128, %v2340, %v2357
        %v2553 = vsel %vm2128, %v2342, %v2359
        %v2556 = vsel %vm2128, %v2344, %v2361
        %v2559 = vsel %vm2128, %v2346, %v2363
        %v2562 = vsel %vm2128, %v2348, %v2365
        %v2565 = vsel %vm2128, %v2350, %v2367
        %v2568 = vsel %vm1943, %v2353, %v2370
        %v2570 = vsel %vm1943, %v2355, %v2372
        %v2572 = vsel %vm1943, %v2357, %v2374
        %v2574 = vsel %vm1943, %v2359, %v2376
        %v2576 = vsel %vm1943, %v2361, %v2378
        %v2578 = vsel %vm1943, %v2363, %v2380
        %v2580 = vsel %vm1943, %v2365, %v2382
        %v2582 = vsel %vm1943, %v2367, %v2384
        %vm2583 = vcmask 850944
        %v2585 = vsel %vm2583, %v2568, %v2387
        %v2588 = vsel %vm2583, %v2570, %v2389
        %v2591 = vsel %vm2583, %v2572, %v2391
        %v2594 = vsel %vm2583, %v2574, %v2393
        %v2597 = vsel %vm2583, %v2576, %v2395
        %v2600 = vsel %vm2583, %v2578, %v2397
        %v2603 = vsel %vm2583, %v2580, %v2399
        %v2606 = vsel %vm2583, %v2582, %v2401
        %v2609 = vsel %vm2165, %v2387, %v2404
        %v2612 = vsel %vm2165, %v2389, %v2406
        %v2615 = vsel %vm2165, %v2391, %v2408
        %v2618 = vsel %vm2165, %v2393, %v2410
        %v2621 = vsel %vm2165, %v2395, %v2412
        %v2624 = vsel %vm2165, %v2397, %v2414
        %v2627 = vsel %vm2165, %v2399, %v2416
        %v2630 = vsel %vm2165, %v2401, %v2418
        %v2633 = vsel %vm1980, %v2404, %v2421
        %v2635 = vsel %vm1980, %v2406, %v2423
        %v2637 = vsel %vm1980, %v2408, %v2425
        %v2639 = vsel %vm1980, %v2410, %v2427
        %v2641 = vsel %vm1980, %v2412, %v2429
        %v2643 = vsel %vm1980, %v2414, %v2431
        %v2645 = vsel %vm1980, %v2416, %v2433
        %v2647 = vsel %vm1980, %v2418, %v2435
        %vm2648 = vcmask 916480
        %v2650 = vsel %vm2648, %v2633, %v2438
        %v2653 = vsel %vm2648, %v2635, %v2440
        %v2656 = vsel %vm2648, %v2637, %v2442
        %v2659 = vsel %vm2648, %v2639, %v2444
        %v2662 = vsel %vm2648, %v2641, %v2446
        %v2665 = vsel %vm2648, %v2643, %v2448
        %v2668 = vsel %vm2648, %v2645, %v2450
        %v2671 = vsel %vm2648, %v2647, %v2452
        %v2673 = vld [vmem:[%s1] sm:$0xf]
        %v2674 = vld [vmem:[%s1 + $0x4] sm:$0xf]
        %v2675 = vld [vmem:[%s1 + $0x8] sm:$0xf]
        %v2676 = vld [vmem:[%s1 + $0xc] sm:$0xf]
        %v2677 = vld [vmem:[%s1 + $0x10] sm:$0xf]
        %v2678 = vld [vmem:[%s1 + $0x14] sm:$0xf]
        %v2679 = vld [vmem:[%s1 + $0x18] sm:$0xf]
        %v2680 = vld [vmem:[%s1 + $0x1c] sm:$0xf]
        %v2681 = vld [vmem:[%s1 + $0x20] sm:$0xf]
        %v2682 = vld [vmem:[%s1 + $0x24] sm:$0xf]
        %v2683 = vld [vmem:[%s1 + $0x28] sm:$0xf]
        %v2684 = vld [vmem:[%s1 + $0x2c] sm:$0xf]
        %v2685 = vld [vmem:[%s1 + $0x30] sm:$0xf]
        %v2686 = vld [vmem:[%s1 + $0x34] sm:$0xf]
        %v2687 = vld [vmem:[%s1 + $0x38] sm:$0xf]
        %v2688 = vld [vmem:[%s1 + $0x3c] sm:$0xf]
        %v2689 = vld [vmem:[%s1 + $0x40] sm:$0xf]
        %v2690 = vld [vmem:[%s1 + $0x44] sm:$0xf]
        %v2691 = vld [vmem:[%s1 + $0x48] sm:$0xf]
        %v2692 = vld [vmem:[%s1 + $0x4c] sm:$0xf]
        %v2693 = vld [vmem:[%s1 + $0x50] sm:$0xf]
        %v2694 = vld [vmem:[%s1 + $0x54] sm:$0xf]
        %v2695 = vld [vmem:[%s1 + $0x58] sm:$0xf]
        %v2696 = vld [vmem:[%s1 + $0x5c] sm:$0xf]
        %v2697 = vld [vmem:[%s1 + $0x60] sm:$0xf]
        %v2698 = vld [vmem:[%s1 + $0x64] sm:$0xf]
        %v2699 = vld [vmem:[%s1 + $0x68] sm:$0xf]
        %v2700 = vld [vmem:[%s1 + $0x6c] sm:$0xf]
        %v2701 = vld [vmem:[%s1 + $0x70] sm:$0xf]
        %v2702 = vld [vmem:[%s1 + $0x74] sm:$0xf]
        %v2703 = vld [vmem:[%s1 + $0x78] sm:$0xf]
        %v2704 = vld [vmem:[%s1 + $0x7c] sm:$0xf]
        %v2705 = vld [vmem:[%s1 + $0x80] sm:$0xf]
        %v2706 = vld [vmem:[%s1 + $0x84] sm:$0xf]
        %v2707 = vld [vmem:[%s1 + $0x88] sm:$0xf]
        %v2708 = vld [vmem:[%s1 + $0x8c] sm:$0xf]
        %v2709 = vld [vmem:[%s1 + $0x90] sm:$0xf]
        %v2710 = vld [vmem:[%s1 + $0x94] sm:$0xf]
        %v2711 = vld [vmem:[%s1 + $0x98] sm:$0xf]
        %v2712 = vld [vmem:[%s1 + $0x9c] sm:$0xf]
        %v2713 = vld [vmem:[%s1 + $0xa0] sm:$0xf]
        %v2714 = vld [vmem:[%s1 + $0xa4] sm:$0xf]
        %v2715 = vld [vmem:[%s1 + $0xa8] sm:$0xf]
        %v2716 = vld [vmem:[%s1 + $0xac] sm:$0xf]
        %v2717 = vld [vmem:[%s1 + $0xb0] sm:$0xf]
        %v2718 = vld [vmem:[%s1 + $0xb4] sm:$0xf]
        %v2719 = vld [vmem:[%s1 + $0xb8] sm:$0xf]
        %v2720 = vld [vmem:[%s1 + $0xbc] sm:$0xf]
        %v2721 = vld [vmem:[%s1 + $0xc0] sm:$0xf]
        %v2722 = vld [vmem:[%s1 + $0xc4] sm:$0xf]
        %v2723 = vld [vmem:[%s1 + $0xc8] sm:$0xf]
        %v2724 = vld [vmem:[%s1 + $0xcc] sm:$0xf]
        %v2725 = vld [vmem:[%s1 + $0xd0] sm:$0xf]
        %v2726 = vld [vmem:[%s1 + $0xd4] sm:$0xf]
        %v2727 = vld [vmem:[%s1 + $0xd8] sm:$0xf]
        %v2728 = vld [vmem:[%s1 + $0xdc] sm:$0xf]
        %v2729 = vld [vmem:[%s1 + $0xe0] sm:$0xf]
        %v2730 = vld [vmem:[%s1 + $0xe4] sm:$0xf]
        %v2731 = vld [vmem:[%s1 + $0xe8] sm:$0xf]
        %v2732 = vld [vmem:[%s1 + $0xec] sm:$0xf]
        %v2733 = vld [vmem:[%s1 + $0xf0] sm:$0xf]
        %v2734 = vld [vmem:[%s1 + $0xf4] sm:$0xf]
        %v2735 = vld [vmem:[%s1 + $0xf8] sm:$0xf]
        %v2736 = vld [vmem:[%s1 + $0xfc] sm:$0xf]
        %v2737 = vld [vmem:[%s1 + $0x100] sm:$0xf]
        %v2738 = vld [vmem:[%s1 + $0x104] sm:$0xf]
        %v2739 = vld [vmem:[%s1 + $0x108] sm:$0xf]
        %v2740 = vld [vmem:[%s1 + $0x10c] sm:$0xf]
        %v2741 = vld [vmem:[%s1 + $0x110] sm:$0xf]
        %v2742 = vld [vmem:[%s1 + $0x114] sm:$0xf]
        %v2743 = vld [vmem:[%s1 + $0x118] sm:$0xf]
        %v2744 = vld [vmem:[%s1 + $0x11c] sm:$0xf]
        %v2745 = vld [vmem:[%s1 + $0x120] sm:$0xf]
        %v2746 = vld [vmem:[%s1 + $0x124] sm:$0xf]
        %v2747 = vld [vmem:[%s1 + $0x128] sm:$0xf]
        %v2748 = vld [vmem:[%s1 + $0x12c] sm:$0xf]
        %v2749 = vld [vmem:[%s1 + $0x130] sm:$0xf]
        %v2750 = vld [vmem:[%s1 + $0x134] sm:$0xf]
        %v2751 = vld [vmem:[%s1 + $0x138] sm:$0xf]
        %v2752 = vld [vmem:[%s1 + $0x13c] sm:$0xf]
        %v2753 = vld [vmem:[%s1 + $0x140] sm:$0xf]
        %v2754 = vld [vmem:[%s1 + $0x144] sm:$0xf]
        %v2755 = vld [vmem:[%s1 + $0x148] sm:$0xf]
        %v2756 = vld [vmem:[%s1 + $0x14c] sm:$0xf]
        %v2757 = vld [vmem:[%s1 + $0x150] sm:$0xf]
        %v2758 = vld [vmem:[%s1 + $0x154] sm:$0xf]
        %v2759 = vld [vmem:[%s1 + $0x158] sm:$0xf]
        %v2760 = vld [vmem:[%s1 + $0x15c] sm:$0xf]
        %v2761 = vld [vmem:[%s1 + $0x160] sm:$0xf]
        %v2762 = vld [vmem:[%s1 + $0x164] sm:$0xf]
        %v2763 = vld [vmem:[%s1 + $0x168] sm:$0xf]
        %v2764 = vld [vmem:[%s1 + $0x16c] sm:$0xf]
        %v2765 = vld [vmem:[%s1 + $0x170] sm:$0xf]
        %v2766 = vld [vmem:[%s1 + $0x174] sm:$0xf]
        %v2767 = vld [vmem:[%s1 + $0x178] sm:$0xf]
        %v2768 = vld [vmem:[%s1 + $0x17c] sm:$0xf]
        %v2769 = vld [vmem:[%s1 + $0x180] sm:$0xf]
        %v2770 = vld [vmem:[%s1 + $0x184] sm:$0xf]
        %v2771 = vld [vmem:[%s1 + $0x188] sm:$0xf]
        %v2772 = vld [vmem:[%s1 + $0x18c] sm:$0xf]
        %v2773 = vld [vmem:[%s1 + $0x190] sm:$0xf]
        %v2774 = vld [vmem:[%s1 + $0x194] sm:$0xf]
        %v2775 = vld [vmem:[%s1 + $0x198] sm:$0xf]
        %v2776 = vld [vmem:[%s1 + $0x19c] sm:$0xf]
        %v2777 = vld [vmem:[%s1 + $0x1a0] sm:$0xf]
        %v2778 = vld [vmem:[%s1 + $0x1a4] sm:$0xf]
        %v2779 = vld [vmem:[%s1 + $0x1a8] sm:$0xf]
        %v2780 = vld [vmem:[%s1 + $0x1ac] sm:$0xf]
        %v2781 = vld [vmem:[%s1 + $0x1b0] sm:$0xf]
        %v2782 = vld [vmem:[%s1 + $0x1b4] sm:$0xf]
        %v2783 = vld [vmem:[%s1 + $0x1b8] sm:$0xf]
        %v2784 = vld [vmem:[%s1 + $0x1bc] sm:$0xf]
        %v2785 = vld [vmem:[%s1 + $0x1c0] sm:$0xf]
        %v2786 = vld [vmem:[%s1 + $0x1c4] sm:$0xf]
        %v2787 = vld [vmem:[%s1 + $0x1c8] sm:$0xf]
        %v2788 = vld [vmem:[%s1 + $0x1cc] sm:$0xf]
        %v2789 = vld [vmem:[%s1 + $0x1d0] sm:$0xf]
        %v2790 = vld [vmem:[%s1 + $0x1d4] sm:$0xf]
        %v2791 = vld [vmem:[%s1 + $0x1d8] sm:$0xf]
        %v2792 = vld [vmem:[%s1 + $0x1dc] sm:$0xf]
        %v2793 = vld [vmem:[%s1 + $0x1e0] sm:$0xf]
        %v2794 = vld [vmem:[%s2] sm:$0x1]
        %v2796 = vlaneseq
        %v2797 = vshrl.u32 %v2796, 7
        %v2798 = vsub.s32 0, %v2797
        %v2799 = vrot.slane %v2794, %v2798
        %v2922 = vunpack.c.l.b16 %v2673
        %v2923 = vunpack.c.l.b16 %v2674
        %v2924 = vunpack.c.l.b16 %v2675
        %v2925 = vunpack.c.l.b16 %v2676
        %v2926 = vunpack.c.l.b16 %v2677
        %v2927 = vunpack.c.l.b16 %v2678
        %v2928 = vunpack.c.l.b16 %v2679
        %v2929 = vunpack.c.l.b16 %v2680
        %v2930 = vunpack.c.l.b16 %v2681
        %v2931 = vunpack.c.l.b16 %v2682
        %v2932 = vunpack.c.l.b16 %v2683
        %v2933 = vunpack.c.l.b16 %v2684
        %v2934 = vunpack.c.l.b16 %v2685
        %v2935 = vunpack.c.l.b16 %v2686
        %v2936 = vunpack.c.l.b16 %v2687
        %v2937 = vunpack.c.l.b16 %v2688
        %v2938 = vunpack.c.l.b16 %v2689
        %v2939 = vunpack.c.l.b16 %v2690
        %v2940 = vunpack.c.l.b16 %v2691
        %v2941 = vunpack.c.l.b16 %v2692
        %v2942 = vunpack.c.l.b16 %v2693
        %v2943 = vunpack.c.l.b16 %v2694
        %v2944 = vunpack.c.l.b16 %v2695
        %v2945 = vunpack.c.l.b16 %v2696
        %v2946 = vunpack.c.l.b16 %v2697
        %v2947 = vunpack.c.l.b16 %v2698
        %v2948 = vunpack.c.l.b16 %v2699
        %v2949 = vunpack.c.l.b16 %v2700
        %v2950 = vunpack.c.l.b16 %v2701
        %v2951 = vunpack.c.l.b16 %v2702
        %v2952 = vunpack.c.l.b16 %v2703
        %v2953 = vunpack.c.l.b16 %v2704
        %v2954 = vunpack.c.l.b16 %v2705
        %v2955 = vunpack.c.l.b16 %v2706
        %v2956 = vunpack.c.l.b16 %v2707
        %v2957 = vunpack.c.l.b16 %v2708
        %v2958 = vunpack.c.l.b16 %v2709
        %v2959 = vunpack.c.l.b16 %v2710
        %v2960 = vunpack.c.l.b16 %v2711
        %v2961 = vunpack.c.l.b16 %v2712
        %v2962 = vunpack.c.l.b16 %v2713
        %v2963 = vunpack.c.l.b16 %v2714
        %v2964 = vunpack.c.l.b16 %v2715
        %v2965 = vunpack.c.l.b16 %v2716
        %v2966 = vunpack.c.l.b16 %v2717
        %v2967 = vunpack.c.l.b16 %v2718
        %v2968 = vunpack.c.l.b16 %v2719
        %v2969 = vunpack.c.l.b16 %v2720
        %v2970 = vunpack.c.l.b16 %v2721
        %v2971 = vunpack.c.l.b16 %v2722
        %v2972 = vunpack.c.l.b16 %v2723
        %v2973 = vunpack.c.l.b16 %v2724
        %v2974 = vunpack.c.l.b16 %v2725
        %v2975 = vunpack.c.l.b16 %v2726
        %v2976 = vunpack.c.l.b16 %v2727
        %v2977 = vunpack.c.l.b16 %v2728
        %v2978 = vunpack.c.l.b16 %v2729
        %v2979 = vunpack.c.l.b16 %v2730
        %v2980 = vunpack.c.l.b16 %v2731
        %v2981 = vunpack.c.l.b16 %v2732
        %v2982 = vunpack.c.l.b16 %v2733
        %v2983 = vunpack.c.l.b16 %v2734
        %v2984 = vunpack.c.l.b16 %v2735
        %v2985 = vunpack.c.l.b16 %v2736
        %v2986 = vunpack.c.l.b16 %v2737
        %v2987 = vunpack.c.l.b16 %v2738
        %v2988 = vunpack.c.l.b16 %v2739
        %v2989 = vunpack.c.l.b16 %v2740
        %v2990 = vunpack.c.l.b16 %v2741
        %v2991 = vunpack.c.l.b16 %v2742
        %v2992 = vunpack.c.l.b16 %v2743
        %v2993 = vunpack.c.l.b16 %v2744
        %v2994 = vunpack.c.l.b16 %v2745
        %v2995 = vunpack.c.l.b16 %v2746
        %v2996 = vunpack.c.l.b16 %v2747
        %v2997 = vunpack.c.l.b16 %v2748
        %v2998 = vunpack.c.l.b16 %v2749
        %v2999 = vunpack.c.l.b16 %v2750
        %v3000 = vunpack.c.l.b16 %v2751
        %v3001 = vunpack.c.l.b16 %v2752
        %v3002 = vunpack.c.l.b16 %v2753
        %v3003 = vunpack.c.l.b16 %v2754
        %v3004 = vunpack.c.l.b16 %v2755
        %v3005 = vunpack.c.l.b16 %v2756
        %v3006 = vunpack.c.l.b16 %v2757
        %v3007 = vunpack.c.l.b16 %v2758
        %v3008 = vunpack.c.l.b16 %v2759
        %v3009 = vunpack.c.l.b16 %v2760
        %v3010 = vunpack.c.l.b16 %v2761
        %v3011 = vunpack.c.l.b16 %v2762
        %v3012 = vunpack.c.l.b16 %v2763
        %v3013 = vunpack.c.l.b16 %v2764
        %v3014 = vunpack.c.l.b16 %v2765
        %v3015 = vunpack.c.l.b16 %v2766
        %v3016 = vunpack.c.l.b16 %v2767
        %v3017 = vunpack.c.l.b16 %v2768
        %v3018 = vunpack.c.l.b16 %v2769
        %v3019 = vunpack.c.l.b16 %v2770
        %v3020 = vunpack.c.l.b16 %v2771
        %v3021 = vunpack.c.l.b16 %v2772
        %v3022 = vunpack.c.l.b16 %v2773
        %v3023 = vunpack.c.l.b16 %v2774
        %v3024 = vunpack.c.l.b16 %v2775
        %v3025 = vunpack.c.l.b16 %v2776
        %v3026 = vunpack.c.l.b16 %v2777
        %v3027 = vunpack.c.l.b16 %v2778
        %v3028 = vunpack.c.l.b16 %v2779
        %v3029 = vunpack.c.l.b16 %v2780
        %v3030 = vunpack.c.l.b16 %v2781
        %v3031 = vunpack.c.l.b16 %v2782
        %v3032 = vunpack.c.l.b16 %v2783
        %v3033 = vunpack.c.l.b16 %v2784
        %v3034 = vunpack.c.l.b16 %v2785
        %v3035 = vunpack.c.l.b16 %v2786
        %v3036 = vunpack.c.l.b16 %v2787
        %v3037 = vunpack.c.l.b16 %v2788
        %v3038 = vunpack.c.l.b16 %v2789
        %v3039 = vunpack.c.l.b16 %v2790
        %v3040 = vunpack.c.l.b16 %v2791
        %v3041 = vunpack.c.l.b16 %v2792
        %v3042 = vunpack.c.l.b16 %v2793
        %v3043 = vpack.c.b16 %v2923, %v2922
        %v3044 = vpack.c.b16 %v2925, %v2924
        %v3045 = vpack.c.b16 %v2927, %v2926
        %v3046 = vpack.c.b16 %v2929, %v2928
        %v3047 = vpack.c.b16 %v2931, %v2930
        %v3048 = vpack.c.b16 %v2933, %v2932
        %v3049 = vpack.c.b16 %v2935, %v2934
        %v3050 = vpack.c.b16 %v2937, %v2936
        %v3051 = vpack.c.b16 %v2939, %v2938
        %v3052 = vpack.c.b16 %v2941, %v2940
        %v3053 = vpack.c.b16 %v2943, %v2942
        %v3054 = vpack.c.b16 %v2945, %v2944
        %v3055 = vpack.c.b16 %v2947, %v2946
        %v3056 = vpack.c.b16 %v2949, %v2948
        %v3057 = vpack.c.b16 %v2951, %v2950
        %v3058 = vpack.c.b16 %v2953, %v2952
        %v3059 = vpack.c.b16 %v2955, %v2954
        %v3060 = vpack.c.b16 %v2957, %v2956
        %v3061 = vpack.c.b16 %v2959, %v2958
        %v3062 = vpack.c.b16 %v2961, %v2960
        %v3063 = vpack.c.b16 %v2963, %v2962
        %v3064 = vpack.c.b16 %v2965, %v2964
        %v3065 = vpack.c.b16 %v2967, %v2966
        %v3066 = vpack.c.b16 %v2969, %v2968
        %v3067 = vpack.c.b16 %v2971, %v2970
        %v3068 = vpack.c.b16 %v2973, %v2972
        %v3069 = vpack.c.b16 %v2975, %v2974
        %v3070 = vpack.c.b16 %v2977, %v2976
        %v3071 = vpack.c.b16 %v2979, %v2978
        %v3072 = vpack.c.b16 %v2981, %v2980
        %v3073 = vpack.c.b16 %v2983, %v2982
        %v3074 = vpack.c.b16 %v2985, %v2984
        %v3075 = vpack.c.b16 %v2987, %v2986
        %v3076 = vpack.c.b16 %v2989, %v2988
        %v3077 = vpack.c.b16 %v2991, %v2990
        %v3078 = vpack.c.b16 %v2993, %v2992
        %v3079 = vpack.c.b16 %v2995, %v2994
        %v3080 = vpack.c.b16 %v2997, %v2996
        %v3081 = vpack.c.b16 %v2999, %v2998
        %v3082 = vpack.c.b16 %v3001, %v3000
        %v3083 = vpack.c.b16 %v3003, %v3002
        %v3084 = vpack.c.b16 %v3005, %v3004
        %v3085 = vpack.c.b16 %v3007, %v3006
        %v3086 = vpack.c.b16 %v3009, %v3008
        %v3087 = vpack.c.b16 %v3011, %v3010
        %v3088 = vpack.c.b16 %v3013, %v3012
        %v3089 = vpack.c.b16 %v3015, %v3014
        %v3090 = vpack.c.b16 %v3017, %v3016
        %v3091 = vpack.c.b16 %v3019, %v3018
        %v3092 = vpack.c.b16 %v3021, %v3020
        %v3093 = vpack.c.b16 %v3023, %v3022
        %v3094 = vpack.c.b16 %v3025, %v3024
        %v3095 = vpack.c.b16 %v3027, %v3026
        %v3096 = vpack.c.b16 %v3029, %v3028
        %v3097 = vpack.c.b16 %v3031, %v3030
        %v3098 = vpack.c.b16 %v3033, %v3032
        %v3099 = vpack.c.b16 %v3035, %v3034
        %v3100 = vpack.c.b16 %v3037, %v3036
        %v3101 = vpack.c.b16 %v3039, %v3038
        %v3102 = vpack.c.b16 %v3041, %v3040
        %v3103 = vpack.c.b16 %v3042, %v3042
        %v3164 = vsel %vm2202, %v2438, 0
        %v3166 = vsel %vm2202, %v2440, 0
        %v3168 = vsel %vm2202, %v2442, 0
        %v3170 = vsel %vm2202, %v2444, 0
        %v3172 = vsel %vm2202, %v2446, 0
        %v3174 = vsel %vm2202, %v2448, 0
        %v3176 = vsel %vm2202, %v2450, 0
        %v3178 = vsel %vm2202, %v2452, 0
        %vm3180 = vcmask 1043456
        %v3182 = vsel %vm3180, %v3103, 0
        %3184 = vmatprep.subr.bf16.mxu0 0
        %3185 = vmatpush1.bf16.msra.mxu0 %v3050
        %3186 = vmatprep.subr.bf16.mxu0 0
        %3187 = vmatpush1.bf16.msra.mxu0 %v3049
        %3188 = vmatprep.subr.bf16.mxu0 0
        %3189 = vmatpush1.bf16.msra.mxu0 %v3048
        %3190 = vmatprep.subr.bf16.mxu0 0
        %3191 = vmatpush1.bf16.msra.mxu0 %v3047
        %3192 = vmatprep.subr.bf16.mxu0 0
        %3193 = vmatpush1.bf16.msra.mxu0 %v3046
        %3194 = vmatprep.subr.bf16.mxu0 0
        %3195 = vmatpush1.bf16.msra.mxu0 %v3045
        %3196 = vmatprep.subr.bf16.mxu0 0
        %3197 = vmatpush1.bf16.msra.mxu0 %v3044
        %3198 = vmatprep.subr.bf16.mxu0 0
        %3199 = vmatpush1.bf16.msra.mxu0 %v3043
        %3200 = vmatprep.subr.bf16.mxu0 0
        %3201 = vmatpush2.bf16.msra.mxu0 %v3058
        %3202 = vmatprep.subr.bf16.mxu0 0
        %3203 = vmatpush2.bf16.msra.mxu0 %v3057
        %3204 = vmatprep.subr.bf16.mxu0 0
        %3205 = vmatpush2.bf16.msra.mxu0 %v3056
        %3206 = vmatprep.subr.bf16.mxu0 0
        %3207 = vmatpush2.bf16.msra.mxu0 %v3055
        %3208 = vmatprep.subr.bf16.mxu0 0
        %3209 = vmatpush2.bf16.msra.mxu0 %v3054
        %3210 = vmatprep.subr.bf16.mxu0 0
        %3211 = vmatpush2.bf16.msra.mxu0 %v3053
        %3212 = vmatprep.subr.bf16.mxu0 0
        %3213 = vmatpush2.bf16.msra.mxu0 %v3052
        %3214 = vmatprep.subr.bf16.mxu0 0
        %3215 = vmatpush2.bf16.msra.mxu0 %v3051
        %3216 = vmatprep.mubr.bf16.mxu0 %v2479
        %3217 = vmatmul.mubr.bf16.gmra.mxu0 %v2455
        %v3218 = vpop.f32.mrf.mxu0
        %v3219 = vadd.f32 %v2799, %v3218
        %v3220 = vpop.f32.mrf.mxu0
        %v3221 = vpop.f32.mrf.mxu0
        %v3222 = vadd.f32 %v2799, %v3221
        %v3223 = vpop.f32.mrf.mxu0
        %3224 = vmatprep.mubr.bf16.mxu0 %v2482
        %3225 = vmatmul.mubr.bf16.gmra.mxu0 %v2458
        %v3226 = vpop.f32.mrf.mxu0
        %v3227 = vadd.f32 %v2799, %v3226
        %v3228 = vpop.f32.mrf.mxu0
        %v3229 = vpop.f32.mrf.mxu0
        %v3230 = vadd.f32 %v2799, %v3229
        %v3231 = vpop.f32.mrf.mxu0
        %3232 = vmatprep.mubr.bf16.mxu0 %v2485
        %3233 = vmatmul.mubr.bf16.gmra.mxu0 %v2461
        %v3234 = vpop.f32.mrf.mxu0
        %v3235 = vadd.f32 %v2799, %v3234
        %v3236 = vpop.f32.mrf.mxu0
        %v3237 = vpop.f32.mrf.mxu0
        %v3238 = vadd.f32 %v2799, %v3237
        %v3239 = vpop.f32.mrf.mxu0
        %3240 = vmatprep.mubr.bf16.mxu0 %v2488
        %3241 = vmatmul.mubr.bf16.gmra.mxu0 %v2464
        %v3242 = vpop.f32.mrf.mxu0
        %v3243 = vadd.f32 %v2799, %v3242
        %v3244 = vpop.f32.mrf.mxu0
        %v3245 = vpop.f32.mrf.mxu0
        %v3246 = vadd.f32 %v2799, %v3245
        %v3247 = vpop.f32.mrf.mxu0
        %3248 = vmatprep.mubr.bf16.mxu0 %v2491
        %3249 = vmatmul.mubr.bf16.gmra.mxu0 %v2467
        %v3250 = vpop.f32.mrf.mxu0
        %v3251 = vadd.f32 %v2799, %v3250
        %v3252 = vpop.f32.mrf.mxu0
        %v3253 = vpop.f32.mrf.mxu0
        %v3254 = vadd.f32 %v2799, %v3253
        %v3255 = vpop.f32.mrf.mxu0
        %3256 = vmatprep.mubr.bf16.mxu0 %v2494
        %3257 = vmatmul.mubr.bf16.gmra.mxu0 %v2470
        %v3258 = vpop.f32.mrf.mxu0
        %v3259 = vadd.f32 %v2799, %v3258
        %v3260 = vpop.f32.mrf.mxu0
        %v3261 = vpop.f32.mrf.mxu0
        %v3262 = vadd.f32 %v2799, %v3261
        %v3263 = vpop.f32.mrf.mxu0
        %3264 = vmatprep.mubr.bf16.mxu0 %v2497
        %3265 = vmatmul.mubr.bf16.gmra.mxu0 %v2473
        %v3266 = vpop.f32.mrf.mxu0
        %v3267 = vadd.f32 %v2799, %v3266
        %v3268 = vpop.f32.mrf.mxu0
        %v3269 = vpop.f32.mrf.mxu0
        %v3270 = vadd.f32 %v2799, %v3269
        %v3271 = vpop.f32.mrf.mxu0
        %3272 = vmatprep.mubr.bf16.mxu0 %v2500
        %3273 = vmatmul.mubr.bf16.gmra.mxu0 %v2476
        %v3274 = vpop.f32.mrf.mxu0
        %v3275 = vadd.f32 %v2799, %v3274
        %v3276 = vpop.f32.mrf.mxu0
        %v3277 = vpop.f32.mrf.mxu0
        %v3278 = vadd.f32 %v2799, %v3277
        %v3279 = vpop.f32.mrf.mxu0
        %3280 = vdwg.mxu0
        %3281 = vmatprep.subr.bf16.mxu0 0
        %3282 = vmatpush1.bf16.msra.mxu0 %v3066
        %3283 = vmatprep.subr.bf16.mxu0 0
        %3284 = vmatpush1.bf16.msra.mxu0 %v3065
        %3285 = vmatprep.subr.bf16.mxu0 0
        %3286 = vmatpush1.bf16.msra.mxu0 %v3064
        %3287 = vmatprep.subr.bf16.mxu0 0
        %3288 = vmatpush1.bf16.msra.mxu0 %v3063
        %3289 = vmatprep.subr.bf16.mxu0 0
        %3290 = vmatpush1.bf16.msra.mxu0 %v3062
        %3291 = vmatprep.subr.bf16.mxu0 0
        %3292 = vmatpush1.bf16.msra.mxu0 %v3061
        %3293 = vmatprep.subr.bf16.mxu0 0
        %3294 = vmatpush1.bf16.msra.mxu0 %v3060
        %3295 = vmatprep.subr.bf16.mxu0 0
        %3296 = vmatpush1.bf16.msra.mxu0 %v3059
        %3297 = vmatprep.subr.bf16.mxu0 0
        %3298 = vmatpush2.bf16.msra.mxu0 %v3074
        %3299 = vmatprep.subr.bf16.mxu0 0
        %3300 = vmatpush2.bf16.msra.mxu0 %v3073
        %3301 = vmatprep.subr.bf16.mxu0 0
        %3302 = vmatpush2.bf16.msra.mxu0 %v3072
        %3303 = vmatprep.subr.bf16.mxu0 0
        %3304 = vmatpush2.bf16.msra.mxu0 %v3071
        %3305 = vmatprep.subr.bf16.mxu0 0
        %3306 = vmatpush2.bf16.msra.mxu0 %v3070
        %3307 = vmatprep.subr.bf16.mxu0 0
        %3308 = vmatpush2.bf16.msra.mxu0 %v3069
        %3309 = vmatprep.subr.bf16.mxu0 0
        %3310 = vmatpush2.bf16.msra.mxu0 %v3068
        %3311 = vmatprep.subr.bf16.mxu0 0
        %3312 = vmatpush2.bf16.msra.mxu0 %v3067
        %3313 = vmatprep.mubr.bf16.mxu0 %v2544
        %3314 = vmatmul.mubr.bf16.gmra.mxu0 %v2520
        %v3315 = vpop.f32.mrf.mxu0
        %v3316 = vadd.f32 %v3219, %v3315
        %v3317 = vpop.f32.mrf.mxu0
        %v3318 = vpop.f32.mrf.mxu0
        %v3319 = vadd.f32 %v3222, %v3318
        %v3320 = vpop.f32.mrf.mxu0
        %3321 = vmatprep.mubr.bf16.mxu0 %v2547
        %3322 = vmatmul.mubr.bf16.gmra.mxu0 %v2523
        %v3323 = vpop.f32.mrf.mxu0
        %v3324 = vadd.f32 %v3227, %v3323
        %v3325 = vpop.f32.mrf.mxu0
        %v3326 = vpop.f32.mrf.mxu0
        %v3327 = vadd.f32 %v3230, %v3326
        %v3328 = vpop.f32.mrf.mxu0
        %3329 = vmatprep.mubr.bf16.mxu0 %v2550
        %3330 = vmatmul.mubr.bf16.gmra.mxu0 %v2526
        %v3331 = vpop.f32.mrf.mxu0
        %v3332 = vadd.f32 %v3235, %v3331
        %v3333 = vpop.f32.mrf.mxu0
        %v3334 = vpop.f32.mrf.mxu0
        %v3335 = vadd.f32 %v3238, %v3334
        %v3336 = vpop.f32.mrf.mxu0
        %3337 = vmatprep.mubr.bf16.mxu0 %v2553
        %3338 = vmatmul.mubr.bf16.gmra.mxu0 %v2529
        %v3339 = vpop.f32.mrf.mxu0
        %v3340 = vadd.f32 %v3243, %v3339
        %v3341 = vpop.f32.mrf.mxu0
        %v3342 = vpop.f32.mrf.mxu0
        %v3343 = vadd.f32 %v3246, %v3342
        %v3344 = vpop.f32.mrf.mxu0
        %3345 = vmatprep.mubr.bf16.mxu0 %v2556
        %3346 = vmatmul.mubr.bf16.gmra.mxu0 %v2532
        %v3347 = vpop.f32.mrf.mxu0
        %v3348 = vadd.f32 %v3251, %v3347
        %v3349 = vpop.f32.mrf.mxu0
        %v3350 = vpop.f32.mrf.mxu0
        %v3351 = vadd.f32 %v3254, %v3350
        %v3352 = vpop.f32.mrf.mxu0
        %3353 = vmatprep.mubr.bf16.mxu0 %v2559
        %3354 = vmatmul.mubr.bf16.gmra.mxu0 %v2535
        %v3355 = vpop.f32.mrf.mxu0
        %v3356 = vadd.f32 %v3259, %v3355
        %v3357 = vpop.f32.mrf.mxu0
        %v3358 = vpop.f32.mrf.mxu0
        %v3359 = vadd.f32 %v3262, %v3358
        %v3360 = vpop.f32.mrf.mxu0
        %3361 = vmatprep.mubr.bf16.mxu0 %v2562
        %3362 = vmatmul.mubr.bf16.gmra.mxu0 %v2538
        %v3363 = vpop.f32.mrf.mxu0
        %v3364 = vadd.f32 %v3267, %v3363
        %v3365 = vpop.f32.mrf.mxu0
        %v3366 = vpop.f32.mrf.mxu0
        %v3367 = vadd.f32 %v3270, %v3366
        %v3368 = vpop.f32.mrf.mxu0
        %3369 = vmatprep.mubr.bf16.mxu0 %v2565
        %3370 = vmatmul.mubr.bf16.gmra.mxu0 %v2541
        %v3371 = vpop.f32.mrf.mxu0
        %v3372 = vadd.f32 %v3275, %v3371
        %v3373 = vpop.f32.mrf.mxu0
        %v3374 = vpop.f32.mrf.mxu0
        %v3375 = vadd.f32 %v3278, %v3374
        %v3376 = vpop.f32.mrf.mxu0
        %3377 = vdwg.mxu0
        %3378 = vmatprep.subr.bf16.mxu0 0
        %3379 = vmatpush1.bf16.msra.mxu0 %v3082
        %3380 = vmatprep.subr.bf16.mxu0 0
        %3381 = vmatpush1.bf16.msra.mxu0 %v3081
        %3382 = vmatprep.subr.bf16.mxu0 0
        %3383 = vmatpush1.bf16.msra.mxu0 %v3080
        %3384 = vmatprep.subr.bf16.mxu0 0
        %3385 = vmatpush1.bf16.msra.mxu0 %v3079
        %3386 = vmatprep.subr.bf16.mxu0 0
        %3387 = vmatpush1.bf16.msra.mxu0 %v3078
        %3388 = vmatprep.subr.bf16.mxu0 0
        %3389 = vmatpush1.bf16.msra.mxu0 %v3077
        %3390 = vmatprep.subr.bf16.mxu0 0
        %3391 = vmatpush1.bf16.msra.mxu0 %v3076
        %3392 = vmatprep.subr.bf16.mxu0 0
        %3393 = vmatpush1.bf16.msra.mxu0 %v3075
        %3394 = vmatprep.subr.bf16.mxu0 0
        %3395 = vmatpush2.bf16.msra.mxu0 %v3090
        %3396 = vmatprep.subr.bf16.mxu0 0
        %3397 = vmatpush2.bf16.msra.mxu0 %v3089
        %3398 = vmatprep.subr.bf16.mxu0 0
        %3399 = vmatpush2.bf16.msra.mxu0 %v3088
        %3400 = vmatprep.subr.bf16.mxu0 0
        %3401 = vmatpush2.bf16.msra.mxu0 %v3087
        %3402 = vmatprep.subr.bf16.mxu0 0
        %3403 = vmatpush2.bf16.msra.mxu0 %v3086
        %3404 = vmatprep.subr.bf16.mxu0 0
        %3405 = vmatpush2.bf16.msra.mxu0 %v3085
        %3406 = vmatprep.subr.bf16.mxu0 0
        %3407 = vmatpush2.bf16.msra.mxu0 %v3084
        %3408 = vmatprep.subr.bf16.mxu0 0
        %3409 = vmatpush2.bf16.msra.mxu0 %v3083
        %3410 = vmatprep.mubr.bf16.mxu0 %v2609
        %3411 = vmatmul.mubr.bf16.gmra.mxu0 %v2585
        %v3412 = vpop.f32.mrf.mxu0
        %v3413 = vadd.f32 %v3316, %v3412
        %v3414 = vpop.f32.mrf.mxu0
        %v3415 = vpop.f32.mrf.mxu0
        %v3416 = vadd.f32 %v3319, %v3415
        %v3417 = vpop.f32.mrf.mxu0
        %3418 = vmatprep.mubr.bf16.mxu0 %v2612
        %3419 = vmatmul.mubr.bf16.gmra.mxu0 %v2588
        %v3420 = vpop.f32.mrf.mxu0
        %v3421 = vadd.f32 %v3324, %v3420
        %v3422 = vpop.f32.mrf.mxu0
        %v3423 = vpop.f32.mrf.mxu0
        %v3424 = vadd.f32 %v3327, %v3423
        %v3425 = vpop.f32.mrf.mxu0
        %3426 = vmatprep.mubr.bf16.mxu0 %v2615
        %3427 = vmatmul.mubr.bf16.gmra.mxu0 %v2591
        %v3428 = vpop.f32.mrf.mxu0
        %v3429 = vadd.f32 %v3332, %v3428
        %v3430 = vpop.f32.mrf.mxu0
        %v3431 = vpop.f32.mrf.mxu0
        %v3432 = vadd.f32 %v3335, %v3431
        %v3433 = vpop.f32.mrf.mxu0
        %3434 = vmatprep.mubr.bf16.mxu0 %v2618
        %3435 = vmatmul.mubr.bf16.gmra.mxu0 %v2594
        %v3436 = vpop.f32.mrf.mxu0
        %v3437 = vadd.f32 %v3340, %v3436
        %v3438 = vpop.f32.mrf.mxu0
        %v3439 = vpop.f32.mrf.mxu0
        %v3440 = vadd.f32 %v3343, %v3439
        %v3441 = vpop.f32.mrf.mxu0
        %3442 = vmatprep.mubr.bf16.mxu0 %v2621
        %3443 = vmatmul.mubr.bf16.gmra.mxu0 %v2597
        %v3444 = vpop.f32.mrf.mxu0
        %v3445 = vadd.f32 %v3348, %v3444
        %v3446 = vpop.f32.mrf.mxu0
        %v3447 = vpop.f32.mrf.mxu0
        %v3448 = vadd.f32 %v3351, %v3447
        %v3449 = vpop.f32.mrf.mxu0
        %3450 = vmatprep.mubr.bf16.mxu0 %v2624
        %3451 = vmatmul.mubr.bf16.gmra.mxu0 %v2600
        %v3452 = vpop.f32.mrf.mxu0
        %v3453 = vadd.f32 %v3356, %v3452
        %v3454 = vpop.f32.mrf.mxu0
        %v3455 = vpop.f32.mrf.mxu0
        %v3456 = vadd.f32 %v3359, %v3455
        %v3457 = vpop.f32.mrf.mxu0
        %3458 = vmatprep.mubr.bf16.mxu0 %v2627
        %3459 = vmatmul.mubr.bf16.gmra.mxu0 %v2603
        %v3460 = vpop.f32.mrf.mxu0
        %v3461 = vadd.f32 %v3364, %v3460
        %v3462 = vpop.f32.mrf.mxu0
        %v3463 = vpop.f32.mrf.mxu0
        %v3464 = vadd.f32 %v3367, %v3463
        %v3465 = vpop.f32.mrf.mxu0
        %3466 = vmatprep.mubr.bf16.mxu0 %v2630
        %3467 = vmatmul.mubr.bf16.gmra.mxu0 %v2606
        %v3468 = vpop.f32.mrf.mxu0
        %v3469 = vadd.f32 %v3372, %v3468
        %v3470 = vpop.f32.mrf.mxu0
        %v3471 = vpop.f32.mrf.mxu0
        %v3472 = vadd.f32 %v3375, %v3471
        %v3473 = vpop.f32.mrf.mxu0
        %3474 = vdwg.mxu0
        %3475 = vmatprep.subr.bf16.mxu0 0
        %3476 = vmatpush1.bf16.msra.mxu0 %v3098
        %3477 = vmatprep.subr.bf16.mxu0 0
        %3478 = vmatpush1.bf16.msra.mxu0 %v3097
        %3479 = vmatprep.subr.bf16.mxu0 0
        %3480 = vmatpush1.bf16.msra.mxu0 %v3096
        %3481 = vmatprep.subr.bf16.mxu0 0
        %3482 = vmatpush1.bf16.msra.mxu0 %v3095
        %3483 = vmatprep.subr.bf16.mxu0 0
        %3484 = vmatpush1.bf16.msra.mxu0 %v3094
        %3485 = vmatprep.subr.bf16.mxu0 0
        %3486 = vmatpush1.bf16.msra.mxu0 %v3093
        %3487 = vmatprep.subr.bf16.mxu0 0
        %3488 = vmatpush1.bf16.msra.mxu0 %v3092
        %3489 = vmatprep.subr.bf16.mxu0 0
        %3490 = vmatpush1.bf16.msra.mxu0 %v3091
        %3491 = vmatprep.subr.bf16.mxu0 0
        %3492 = vmatpush2.bf16.msra.mxu0 0
        %3493 = vmatprep.subr.bf16.mxu0 0
        %3494 = vmatpush2.bf16.msra.mxu0 0
        %3495 = vmatprep.subr.bf16.mxu0 0
        %3496 = vmatpush2.bf16.msra.mxu0 0
        %3497 = vmatprep.subr.bf16.mxu0 0
        %3498 = vmatpush2.bf16.msra.mxu0 %v3182
        %3499 = vmatprep.subr.bf16.mxu0 0
        %3500 = vmatpush2.bf16.msra.mxu0 %v3102
        %3501 = vmatprep.subr.bf16.mxu0 0
        %3502 = vmatpush2.bf16.msra.mxu0 %v3101
        %3503 = vmatprep.subr.bf16.mxu0 0
        %3504 = vmatpush2.bf16.msra.mxu0 %v3100
        %3505 = vmatprep.subr.bf16.mxu0 0
        %3506 = vmatpush2.bf16.msra.mxu0 %v3099
        %3507 = vmatprep.mubr.bf16.mxu0 %v3164
        %3508 = vmatmul.mubr.bf16.gmra.mxu0 %v2650
        %v3509 = vpop.f32.mrf.mxu0
        %v3510 = vadd.f32 %v3413, %v3509
        %v3511 = vpop.f32.mrf.mxu0
        %v3512 = vpop.f32.mrf.mxu0
        %v3513 = vadd.f32 %v3416, %v3512
        %v3514 = vpop.f32.mrf.mxu0
        %3515 = vmatprep.mubr.bf16.mxu0 %v3166
        %3516 = vmatmul.mubr.bf16.gmra.mxu0 %v2653
        %v3517 = vpop.f32.mrf.mxu0
        %v3518 = vadd.f32 %v3421, %v3517
        %v3519 = vpop.f32.mrf.mxu0
        %v3520 = vpop.f32.mrf.mxu0
        %v3521 = vadd.f32 %v3424, %v3520
        %v3522 = vpop.f32.mrf.mxu0
        %3523 = vmatprep.mubr.bf16.mxu0 %v3168
        %3524 = vmatmul.mubr.bf16.gmra.mxu0 %v2656
        %v3525 = vpop.f32.mrf.mxu0
        %v3526 = vadd.f32 %v3429, %v3525
        %v3527 = vpop.f32.mrf.mxu0
        %v3528 = vpop.f32.mrf.mxu0
        %v3529 = vadd.f32 %v3432, %v3528
        %v3530 = vpop.f32.mrf.mxu0
        %3531 = vmatprep.mubr.bf16.mxu0 %v3170
        %3532 = vmatmul.mubr.bf16.gmra.mxu0 %v2659
        %v3533 = vpop.f32.mrf.mxu0
        %v3534 = vadd.f32 %v3437, %v3533
        %v3535 = vpop.f32.mrf.mxu0
        %v3536 = vpop.f32.mrf.mxu0
        %v3537 = vadd.f32 %v3440, %v3536
        %v3538 = vpop.f32.mrf.mxu0
        %3539 = vmatprep.mubr.bf16.mxu0 %v3172
        %3540 = vmatmul.mubr.bf16.gmra.mxu0 %v2662
        %v3541 = vpop.f32.mrf.mxu0
        %v3542 = vadd.f32 %v3445, %v3541
        %v3543 = vpop.f32.mrf.mxu0
        %v3544 = vpop.f32.mrf.mxu0
        %v3545 = vadd.f32 %v3448, %v3544
        %v3546 = vpop.f32.mrf.mxu0
        %3547 = vmatprep.mubr.bf16.mxu0 %v3174
        %3548 = vmatmul.mubr.bf16.gmra.mxu0 %v2665
        %v3549 = vpop.f32.mrf.mxu0
        %v3550 = vadd.f32 %v3453, %v3549
        %v3551 = vpop.f32.mrf.mxu0
        %v3552 = vpop.f32.mrf.mxu0
        %v3553 = vadd.f32 %v3456, %v3552
        %v3554 = vpop.f32.mrf.mxu0
        %3555 = vmatprep.mubr.bf16.mxu0 %v3176
        %3556 = vmatmul.mubr.bf16.gmra.mxu0 %v2668
        %v3557 = vpop.f32.mrf.mxu0
        %v3558 = vadd.f32 %v3461, %v3557
        %v3559 = vpop.f32.mrf.mxu0
        %v3560 = vpop.f32.mrf.mxu0
        %v3561 = vadd.f32 %v3464, %v3560
        %v3562 = vpop.f32.mrf.mxu0
        %3563 = vmatprep.mubr.bf16.mxu0 %v3178
        %3564 = vmatmul.mubr.bf16.gmra.mxu0 %v2671
        %v3565 = vpop.f32.mrf.mxu0
        %v3566 = vadd.f32 %v3469, %v3565
        %v3567 = vpop.f32.mrf.mxu0
        %v3568 = vpop.f32.mrf.mxu0
        %v3569 = vadd.f32 %v3472, %v3568
        %v3570 = vpop.f32.mrf.mxu0
        %3571 = vdwg.mxu0
        %3572 = vst [vmem:[%s177] sm:$0xff] %v3510
        %3573 = vst [vmem:[%s177 + $0x8] sm:$0xff] %v3513
        %3574 = vst [vmem:[%s177 + $0x10] sm:$0xff] %v3518
        %3575 = vst [vmem:[%s177 + $0x18] sm:$0xff] %v3521
        %3576 = vst [vmem:[%s177 + $0x20] sm:$0xff] %v3526
        %3577 = vst [vmem:[%s177 + $0x28] sm:$0xff] %v3529
        %3578 = vst [vmem:[%s177 + $0x30] sm:$0xff] %v3534
        %3579 = vst [vmem:[%s177 + $0x38] sm:$0xff] %v3537
        %3580 = vst [vmem:[%s177 + $0x40] sm:$0xff] %v3542
        %3581 = vst [vmem:[%s177 + $0x48] sm:$0xff] %v3545
        %3582 = vst [vmem:[%s177 + $0x50] sm:$0xff] %v3550
        %3583 = vst [vmem:[%s177 + $0x58] sm:$0xff] %v3553
        %3584 = vst [vmem:[%s177 + $0x60] sm:$0xff] %v3558
        %3585 = vst [vmem:[%s177 + $0x68] sm:$0xff] %v3561
        %3586 = vst [vmem:[%s177 + $0x70] sm:$0xff] %v3566
        %3587 = vst [vmem:[%s177 + $0x78] sm:$0xff] %v3569
        %s3588 = sand.u32 %s107, 1
        %s3589 = scalar_lea.sflag [#allocation3], %s3588
        %s3590 = sand.u32 %s107, 1
        %s3591 = smul.addr %s3590, 128
        %s3592 = scalar_lea.vmem [#allocation2], %s3591
        // Predicated region
        $region33: #{tpu_custom_call.1} parent=31 // pred_check
          %p3593 = pneg %p117
        $region34: #{tpu_custom_call.1} parent=31 // pred_check_branch
          %3595 = sbr.rel (%p3593) target = $region36
        $region35: #{tpu_custom_call.1} parent=31 // pred_region
          %s3596 = smul.u32 16, %s22
          %s3598 = ssub.s32 2048, 2048
          %3599 = vsyncadd %s3589, %s3598
          %s3600 = smul.addr %s21, 32
          %s3601 = sadd.s32 %s3596, %s3600
          %s3602 = smul.addr %s3601, 128
          %s3603 = scalar_lea.hbm %s3, %s3602
          %s3604 = sshll.u32 %s3592, 4
          %s3605 = int_to_ptr.vmem [resolvable:$true] %s3604
          %3610 = dma.vmem_to_hbm [thread:$0]  %s3605, 2048, %s3603, %s3589, 128, 128, 8
        $region36: #{tpu_custom_call.1} parent=31 // pred_fallthru
          _
      $region32: #{tpu_custom_call.1} parent=5 // pred_fallthru
        _
      %p3611 = scmp.le.s32.totalorder 2, %s12
      // Predicated region
      $region37: #{tpu_custom_call.1} parent=5 // pred_check
        %p3612 = pneg %p3611
      $region38: #{tpu_custom_call.1} parent=5 // pred_check_branch
        %3614 = sbr.rel (%p3612) target = $region40
      $region39: #{tpu_custom_call.1} parent=5 // pred_region
        %s3615 = ssub.s32 %s12, 2
        // Predicated region
        $region41: #{tpu_custom_call.1} parent=39 // pred_check
          %p3616 = pneg %p123
        $region42: #{tpu_custom_call.1} parent=39 // pred_check_branch
          %3618 = sbr.rel (%p3616) target = $region44
        $region43: #{tpu_custom_call.1} parent=39 // pred_region
          %s3619 = sand.u32 %s108, 1
          %s3620 = scalar_lea.sflag [#allocation3], %s3619
          %s3621 = sand.u32 %s108, 1
          %s3622 = smul.addr %s3621, 128
          %s3623 = scalar_lea.vmem [#allocation2], %s3622
          %3624 = dma.done %s3620, 2048
        $region44: #{tpu_custom_call.1} parent=39 // pred_fallthru
          _
      $region40: #{tpu_custom_call.1} parent=5 // pred_fallthru
        _
    $region6: #{tpu_custom_call.1} parent=1 // loop_footer
      %s16 = sadd.s32 1, %s12
    $region7: #{tpu_custom_call.1} parent=1 // loop_footer_branch
      %11 = sbr.rel target = $region3
    $region8: #{tpu_custom_call.1} parent=1 // loop_exit
      _
    %3625 = vsyncpa [#allocation3], 1
    %s3626 = scalar_lea.sflag [#allocation3], 1
    %3627 = vsyncpa %s3626, 1

</llo_original>
